<compile_context>
chip_gen: v7x
topology: tpu7x:2x2x1
jax: 0.10.0
libtpu: 0.0.40
codegen_flags: <defaults>
</compile_context>

<pallas_src>
import jax
import jax.numpy as jnp
from jax.experimental import pallas as pl
from jax.experimental.pallas import tpu as pltpu


NEG_SLOPE = 0.2   # GATConv default negative_slope


def _round_up(v, m):
    return (v + m - 1) // m * m


def _device_kind():
    try:
        return jax.devices()[0].device_kind.lower()
    except Exception:
        return ""


def gat_kernel(h_ref, asrc_ref, adst_ref, bias_ref, adj_ref, out_ref,
               m_sc, l_sc, acc_sc):
    # h:    [TK, C_pad] bf16 (pre-projected source features, hoisted to wrapper)
    # asrc: [1, TK] f32       adst: [TM, 1] f32      bias: [1, C_pad] f32
    # adj:  [TM, TK] int8 edge multiplicities (0 = no edge / padding)
    # scratch: m_sc [TM,1], l_sc [TM,1], acc_sc [TM,C_pad]  (all f32)
    k = pl.program_id(1)

    @pl.when(k == 0)
    def _():
        m_sc[...] = jnp.full_like(m_sc, -jnp.inf)
        l_sc[...] = jnp.zeros_like(l_sc)
        acc_sc[...] = jnp.zeros_like(acc_sc)

    # Edge logits for this (target-tile, source-tile) block:
    #   e[i, j] = leaky_relu(a_dst[i] + a_src[j])            -> [TM, TK]
    e = adst_ref[...] + asrc_ref[...]
    e = jnp.where(e > 0, e, NEG_SLOPE * e)

    # Edge multiplicities.  No additive mask: non-edge terms are zeroed by the
    # cnt multiplication below.  (Caveat: a non-edge logit that exceeds all edge
    # logits of a row by > ~80 would underflow valid exp terms; does not happen
    # with leaky-relu-scaled logits.)
    cnt = adj_ref[...].astype(jnp.float32)

    # Online (flash-style) softmax over the source dimension.
    m_prev = m_sc[...]
    m_new = jnp.maximum(m_prev, jnp.max(e, axis=-1, keepdims=True))   # [TM, 1]
    scale = jnp.exp(m_prev - m_new)                                   # 0 on k == 0
    p = cnt * jnp.exp(e - m_new)                                      # [TM, TK]
    l_sc[...] = scale * l_sc[...] + jnp.sum(p, axis=-1, keepdims=True)
    acc_sc[...] = scale * acc_sc[...] + jnp.dot(
        p.astype(jnp.bfloat16), h_ref[...], preferred_element_type=jnp.float32)
    m_sc[...] = m_new

    @pl.when(k == pl.num_programs(1) - 1)
    def _():
        denom = l_sc[...]
        # Isolated targets (no incoming edges): denom == 0 -> alpha = 0, so the
        # output row is just the bias (PyG with add_self_loops=False).
        inv = jnp.where(denom > 0, pl.reciprocal(denom, approx=True), 0.0)
        out = acc_sc[...] * inv + bias_ref[...]
        # Module activation (ReLU chosen for `activation`).
        out_ref[...] = jnp.maximum(out, 0.0).astype(out_ref.dtype)


def gat_forward(x, edge_index, w, att_src, att_dst, bias, *,
                tile_m=None, tile_k=None):
    """x: [N, F_in], edge_index: [2, E] int32 (row 0 = src, row 1 = dst)."""
    n, f_in = x.shape
    c = w.shape[1]
    f32 = jnp.float32

    kind = _device_kind()
    is_v7x = ("v7" in kind) or ("7x" in kind)
    if tile_m is None:
        tile_m = 128 if "v5" in kind else 256     # v5e: smaller live tiles
    if tile_k is None:
        tile_k = 1024                             # source-tile width
    vmem_limit = (32 if is_v7x else 64) * 1024 * 1024

    c_pad = _round_up(c, 128)
    tm = tile_m
    tile_k = _round_up(tile_k, tm)                # keep tk a multiple of tm
    n_pad = _round_up(n, tm)
    if n_pad <= tile_k:
        tk = n_pad                                # single source tile
    else:
        n_pad = _round_up(n_pad, tile_k)
        tk = tile_k

    # --- Hoisted projection & attention scalars (done ONCE, not per row tile) ---
    x_pad = jnp.zeros((n_pad, f_in), f32).at[:n, :].set(x.astype(f32))
    w_pad = jnp.zeros((f_in, c_pad), f32).at[:, :c].set(w.astype(f32))
    h32 = x_pad @ w_pad                                        # [N_pad, C_pad] f32
    h_bf16 = h32.astype(jnp.bfloat16)                          # halves HBM/VMEM

    asrc_vec = jnp.zeros((c_pad,), f32).at[:c].set(att_src.reshape(-1).astype(f32))
    adst_vec = jnp.zeros((c_pad,), f32).at[:c].set(att_dst.reshape(-1).astype(f32))
    a_src_row = (h32 @ asrc_vec).reshape(1, n_pad)             # lane-dense [1, N_pad]
    a_dst_col = (h32 @ adst_vec).reshape(n_pad, 1)             # [N_pad, 1]

    bias_pad = jnp.zeros((1, c_pad), f32).at[0, :c].set(bias.astype(f32))

    # Dense edge-multiplicity matrix adj[dst, src], built directly in int8
    # (duplicate edges weighted like PyG's scatter-softmax; >= 128 duplicates of a
    # single (dst, src) pair would wrap int8 -- not expected for real graphs).
    # TODO(synk): for large sparse graphs replace the dense O(N^2) adjacency with
    # CSR neighbor lists + PrefetchScalarGridSpec (O(E) traffic), and cache adj
    # across calls when the graph is static.
    src, dst = edge_index[0], edge_index[1]
    adj = jnp.zeros((n_pad, n_pad), jnp.int8).at[dst, src].add(
        jnp.ones(src.shape, jnp.int8))

    grid = (n_pad // tm, n_pad // tk)

    out_pad = pl.pallas_call(
        gat_kernel,
        out_shape=jax.ShapeDtypeStruct((n_pad, c_pad), jnp.float32),
        grid=grid,
        in_specs=[
            pl.BlockSpec((tk, c_pad), lambda i, k: (k, 0)),   # h (source tile, bf16)
            pl.BlockSpec((1, tk), lambda i, k: (0, k)),       # a_src row (lane-dense)
            pl.BlockSpec((tm, 1), lambda i, k: (i, 0)),       # a_dst (target tile)
            pl.BlockSpec((1, c_pad), lambda i, k: (0, 0)),    # bias (tiny, constant)
            pl.BlockSpec((tm, tk), lambda i, k: (i, k)),      # adjacency tile (int8)
        ],
        out_specs=pl.BlockSpec((tm, c_pad), lambda i, k: (i, 0)),
        scratch_shapes=[
            pltpu.VMEM((tm, 1), jnp.float32),       # running max
            pltpu.VMEM((tm, 1), jnp.float32),       # running denominator
            pltpu.VMEM((tm, c_pad), jnp.float32),   # running accumulator
        ],
        compiler_params=pltpu.CompilerParams(
            dimension_semantics=("parallel", "arbitrary"),
            vmem_limit_bytes=vmem_limit,
        ),
    )(h_bf16, a_src_row, a_dst_col, bias_pad, adj)

    return out_pad[:n, :c]


def _glorot(key, shape):
    fan_in, fan_out = shape[0], shape[-1]
    limit = (6.0 / (fan_in + fan_out)) ** 0.5
    return jax.random.uniform(key, shape, jnp.float32, -limit, limit)


if __name__ == "__main__":
    in_channels, out_channels = 4, 8
    n_nodes, n_edges = 8, 16

    key = jax.random.PRNGKey(0)
    k_x, k_w, k_as, k_ad, k_e = jax.random.split(key, 5)

    # Node features [N, F_in].
    x = jax.random.normal(k_x, (n_nodes, in_channels), jnp.float32)

    # Random edge list [2, E] (row 0 = src, row 1 = dst).
    edge_index = jax.random.randint(k_e, (2, n_edges), 0, n_nodes, jnp.int32)

    # Deterministic parameters (xavier/glorot uniform, zero bias), mirroring
    # GATConv(in_channels, out_channels, heads=1) parameter shapes.
    w = _glorot(k_w, (in_channels, out_channels))      # lin weight (transposed)
    att_src = _glorot(k_as, (1, out_channels))          # att_src [1, H*C], H=1
    att_dst = _glorot(k_ad, (1, out_channels))          # att_dst [1, H*C]
    bias = jnp.zeros((out_channels,), jnp.float32)

    out = gat_forward(x, edge_index, w, att_src, att_dst, bias)
    jax.block_until_ready(out)
    assert out.shape == (n_nodes, out_channels)
    print("KERNEL_OK")
</pallas_src>

<mosaic_0001>
module attributes {stable_mosaic.version = 11 : i64} {
  func.func @gat_kernel(%arg0: i32, %arg1: i32, %arg2: memref<256x128xbf16, #tpu.memory_space<vmem>>, %arg3: memref<1x256xf32, #tpu.memory_space<vmem>>, %arg4: memref<256x1xf32, #tpu.memory_space<vmem>>, %arg5: memref<1x128xf32, #tpu.memory_space<vmem>>, %arg6: memref<256x256xi8, #tpu.memory_space<vmem>>, %arg7: memref<256x128xf32, #tpu.memory_space<vmem>>, %arg8: memref<256x1xf32, #tpu.memory_space<vmem>>, %arg9: memref<256x1xf32, #tpu.memory_space<vmem>>, %arg10: memref<256x128xf32, #tpu.memory_space<vmem>>) attributes {dimension_semantics = [#tpu.dimension_semantics<parallel>, #tpu.dimension_semantics<arbitrary>], iteration_bounds = array<i64: 1, 1>, scalar_prefetch = 0 : i64, scratch_operands = 3 : i64, tpu.core_type = #tpu.core_type<tc>, window_params = [{transform_indices = @transform_0, window_bounds = array<i64: 256, 128>}, {transform_indices = @transform_1, window_bounds = array<i64: 1, 256>}, {transform_indices = @transform_2, window_bounds = array<i64: 256, 1>}, {pipeline_mode = #tpu.pipeline_mode<synchronous>, transform_indices = @transform_3, window_bounds = array<i64: 1, 128>}, {transform_indices = @transform_4, window_bounds = array<i64: 256, 256>}, {transform_indices = @transform_5, window_bounds = array<i64: 256, 128>}]} {
    %c0_i32 = arith.constant 0 : i32
    %0 = arith.cmpi eq, %arg1, %c0_i32 : i32
    %1 = arith.extui %0 : i1 to i32
    %c0_i32_0 = arith.constant 0 : i32
    %2 = arith.cmpi ne, %1, %c0_i32_0 : i32
    scf.if %2 {
      %cst_26 = arith.constant 0xFF800000 : f32
      %43 = vector.broadcast %cst_26 : f32 to vector<256x1xf32>
      %c0_27 = arith.constant 0 : index
      %c0_28 = arith.constant 0 : index
      %44 = vector.load %arg8[%c0_27, %c0_28] : memref<256x1xf32, #tpu.memory_space<vmem>>, vector<256x1xf32>
      tpu.vector_store %arg8[%c0_27, %c0_28], %43 {strides = array<i32>} : memref<256x1xf32, #tpu.memory_space<vmem>>, vector<256x1xf32>,
      %cst_29 = arith.constant 0.000000e+00 : f32
      %45 = vector.broadcast %cst_29 : f32 to vector<256x1xf32>
      %c0_30 = arith.constant 0 : index
      %c0_31 = arith.constant 0 : index
      %46 = vector.load %arg9[%c0_30, %c0_31] : memref<256x1xf32, #tpu.memory_space<vmem>>, vector<256x1xf32>
      tpu.vector_store %arg9[%c0_30, %c0_31], %45 {strides = array<i32>} : memref<256x1xf32, #tpu.memory_space<vmem>>, vector<256x1xf32>,
      %cst_32 = arith.constant 0.000000e+00 : f32
      %47 = vector.broadcast %cst_32 : f32 to vector<256x128xf32>
      %c0_33 = arith.constant 0 : index
      %c0_34 = arith.constant 0 : index
      %48 = vector.load %arg10[%c0_33, %c0_34] : memref<256x128xf32, #tpu.memory_space<vmem>>, vector<256x128xf32>
      tpu.vector_store %arg10[%c0_33, %c0_34], %47 {strides = array<i32>} : memref<256x128xf32, #tpu.memory_space<vmem>>, vector<256x128xf32>,
    } else {
    }
    %c0 = arith.constant 0 : index
    %c0_1 = arith.constant 0 : index
    %3 = vector.load %arg4[%c0, %c0_1] : memref<256x1xf32, #tpu.memory_space<vmem>>, vector<256x1xf32>
    %c0_2 = arith.constant 0 : index
    %c0_3 = arith.constant 0 : index
    %4 = vector.load %arg3[%c0_2, %c0_3] : memref<1x256xf32, #tpu.memory_space<vmem>>, vector<1x256xf32>
    %5 = vector.broadcast %3 : vector<256x1xf32> to vector<256x256xf32>
    %6 = vector.broadcast %4 : vector<1x256xf32> to vector<256x256xf32>
    %7 = arith.addf %5, %6 : vector<256x256xf32>
    %cst = arith.constant 0.000000e+00 : f32
    %8 = vector.broadcast %cst : f32 to vector<256x256xf32>
    %9 = arith.cmpf ogt, %7, %8 : vector<256x256xf32>
    %cst_4 = arith.constant 2.000000e-01 : f32
    %10 = vector.broadcast %cst_4 : f32 to vector<256x256xf32>
    %11 = arith.mulf %10, %7 : vector<256x256xf32>
    %12 = arith.select %9, %7, %11 : vector<256x256xi1>, vector<256x256xf32>
    %c0_5 = arith.constant 0 : index
    %c0_6 = arith.constant 0 : index
    %13 = vector.load %arg6[%c0_5, %c0_6] : memref<256x256xi8, #tpu.memory_space<vmem>>, vector<256x256xi8>
    %14 = arith.sitofp %13 : vector<256x256xi8> to vector<256x256xf32>
    %c0_7 = arith.constant 0 : index
    %c0_8 = arith.constant 0 : index
    %15 = vector.load %arg8[%c0_7, %c0_8] : memref<256x1xf32, #tpu.memory_space<vmem>>, vector<256x1xf32>
    %cst_9 = arith.constant dense<0xFF800000> : vector<256xf32>
    %16 = vector.multi_reduction <maximumf>, %12, %cst_9 [1] : vector<256x256xf32> to vector<256xf32>
    %17 = vector.shape_cast %16 : vector<256xf32> to vector<256x1xf32>
    %18 = arith.maximumf %15, %17 : vector<256x1xf32>
    %19 = arith.subf %15, %18 : vector<256x1xf32>
    %20 = math.exp %19 : vector<256x1xf32>
    %21 = vector.broadcast %18 : vector<256x1xf32> to vector<256x256xf32>
    %22 = arith.subf %12, %21 : vector<256x256xf32>
    %23 = math.exp %22 : vector<256x256xf32>
    %24 = arith.mulf %14, %23 : vector<256x256xf32>
    %c0_10 = arith.constant 0 : index
    %c0_11 = arith.constant 0 : index
    %25 = vector.load %arg9[%c0_10, %c0_11] : memref<256x1xf32, #tpu.memory_space<vmem>>, vector<256x1xf32>
    %26 = arith.mulf %20, %25 : vector<256x1xf32>
    %cst_12 = arith.constant dense<0.000000e+00> : vector<256xf32>
    %27 = vector.multi_reduction <add>, %24, %cst_12 [1] : vector<256x256xf32> to vector<256xf32>
    %28 = vector.shape_cast %27 : vector<256xf32> to vector<256x1xf32>
    %29 = arith.addf %26, %28 : vector<256x1xf32>
    %c0_13 = arith.constant 0 : index
    %c0_14 = arith.constant 0 : index
    %30 = vector.load %arg9[%c0_13, %c0_14] : memref<256x1xf32, #tpu.memory_space<vmem>>, vector<256x1xf32>
    tpu.vector_store %arg9[%c0_13, %c0_14], %29 {strides = array<i32>} : memref<256x1xf32, #tpu.memory_space<vmem>>, vector<256x1xf32>,
    %c0_15 = arith.constant 0 : index
    %c0_16 = arith.constant 0 : index
    %31 = vector.load %arg10[%c0_15, %c0_16] : memref<256x128xf32, #tpu.memory_space<vmem>>, vector<256x128xf32>
    %32 = vector.broadcast %20 : vector<256x1xf32> to vector<256x128xf32>
    %33 = arith.mulf %32, %31 : vector<256x128xf32>
    %34 = arith.truncf %24 : vector<256x256xf32> to vector<256x256xbf16>
    %c0_17 = arith.constant 0 : index
    %c0_18 = arith.constant 0 : index
    %35 = vector.load %arg2[%c0_17, %c0_18] : memref<256x128xbf16, #tpu.memory_space<vmem>>, vector<256x128xbf16>
    %cst_19 = arith.constant dense<0.000000e+00> : vector<256x128xf32>
    %36 = tpu.matmul %34, %35, %cst_19 {dimension_numbers = #tpu.dot_dimension_numbers<[1], [0], [0], [1], [0, 0, 1, 1], [], []>} : vector<256x256xbf16>, vector<256x128xbf16>, vector<256x128xf32> -> vector<256x128xf32>
    %37 = arith.addf %33, %36 : vector<256x128xf32>
    %c0_20 = arith.constant 0 : index
    %c0_21 = arith.constant 0 : index
    %38 = vector.load %arg10[%c0_20, %c0_21] : memref<256x128xf32, #tpu.memory_space<vmem>>, vector<256x128xf32>
    tpu.vector_store %arg10[%c0_20, %c0_21], %37 {strides = array<i32>} : memref<256x128xf32, #tpu.memory_space<vmem>>, vector<256x128xf32>,
    %c0_22 = arith.constant 0 : index
    %c0_23 = arith.constant 0 : index
    %39 = vector.load %arg8[%c0_22, %c0_23] : memref<256x1xf32, #tpu.memory_space<vmem>>, vector<256x1xf32>
    tpu.vector_store %arg8[%c0_22, %c0_23], %18 {strides = array<i32>} : memref<256x1xf32, #tpu.memory_space<vmem>>, vector<256x1xf32>,
    %c0_i32_24 = arith.constant 0 : i32
    %40 = arith.cmpi eq, %arg1, %c0_i32_24 : i32
    %41 = arith.extui %40 : i1 to i32
    %c0_i32_25 = arith.constant 0 : i32
    %42 = arith.cmpi ne, %41, %c0_i32_25 : i32
    scf.if %42 {
      %c0_26 = arith.constant 0 : index
      %c0_27 = arith.constant 0 : index
      %43 = vector.load %arg9[%c0_26, %c0_27] : memref<256x1xf32, #tpu.memory_space<vmem>>, vector<256x1xf32>
      %cst_28 = arith.constant 0.000000e+00 : f32
      %44 = vector.broadcast %cst_28 : f32 to vector<256x1xf32>
      %45 = arith.cmpf ogt, %43, %44 : vector<256x1xf32>
      %46 = tpu.reciprocal %43 {approx = true} : vector<256x1xf32> -> vector<256x1xf32>
      %cst_29 = arith.constant 0.000000e+00 : f32
      %47 = vector.broadcast %cst_29 : f32 to vector<256x1xf32>
      %48 = arith.select %45, %46, %47 : vector<256x1xi1>, vector<256x1xf32>
      %c0_30 = arith.constant 0 : index
      %c0_31 = arith.constant 0 : index
      %49 = vector.load %arg10[%c0_30, %c0_31] : memref<256x128xf32, #tpu.memory_space<vmem>>, vector<256x128xf32>
      %50 = vector.broadcast %48 : vector<256x1xf32> to vector<256x128xf32>
      %51 = arith.mulf %49, %50 : vector<256x128xf32>
      %c0_32 = arith.constant 0 : index
      %c0_33 = arith.constant 0 : index
      %52 = vector.load %arg5[%c0_32, %c0_33] : memref<1x128xf32, #tpu.memory_space<vmem>>, vector<1x128xf32>
      %53 = vector.broadcast %52 : vector<1x128xf32> to vector<256x128xf32>
      %54 = arith.addf %51, %53 : vector<256x128xf32>
      %cst_34 = arith.constant 0.000000e+00 : f32
      %55 = vector.broadcast %cst_34 : f32 to vector<256x128xf32>
      %56 = arith.maximumf %54, %55 : vector<256x128xf32>
      %c0_35 = arith.constant 0 : index
      %c0_36 = arith.constant 0 : index
      %57 = vector.load %arg7[%c0_35, %c0_36] : memref<256x128xf32, #tpu.memory_space<vmem>>, vector<256x128xf32>
      tpu.vector_store %arg7[%c0_35, %c0_36], %56 {strides = array<i32>} : memref<256x128xf32, #tpu.memory_space<vmem>>, vector<256x128xf32>,
    } else {
    }
    return
  }
  func.func @transform_0(%arg0: i32, %arg1: i32) -> (i32, i32) {
    %c0_i32 = arith.constant 0 : i32
    %c0_i32_0 = arith.constant 0 : i32
    return %arg1, %c0_i32 : i32, i32
  }
  func.func @transform_1(%arg0: i32, %arg1: i32) -> (i32, i32) {
    %c0_i32 = arith.constant 0 : i32
    %c0_i32_0 = arith.constant 0 : i32
    return %c0_i32, %arg1 : i32, i32
  }
  func.func @transform_2(%arg0: i32, %arg1: i32) -> (i32, i32) {
    %c0_i32 = arith.constant 0 : i32
    %c0_i32_0 = arith.constant 0 : i32
    return %arg0, %c0_i32 : i32, i32
  }
  func.func @transform_3(%arg0: i32, %arg1: i32) -> (i32, i32) {
    %c0_i32 = arith.constant 0 : i32
    %c0_i32_0 = arith.constant 0 : i32
    %c0_i32_1 = arith.constant 0 : i32
    return %c0_i32, %c0_i32_0 : i32, i32
  }
  func.func @transform_4(%arg0: i32, %arg1: i32) -> (i32, i32) {
    %c0_i32 = arith.constant 0 : i32
    return %arg0, %arg1 : i32, i32
  }
  func.func @transform_5(%arg0: i32, %arg1: i32) -> (i32, i32) {
    %c0_i32 = arith.constant 0 : i32
    %c0_i32_0 = arith.constant 0 : i32
    return %arg0, %c0_i32 : i32, i32
  }
}

</mosaic_0001>

<llo_original>
// kernel: tpu_custom_call.1
$region0: #{tpu_custom_call.1}
  #allocation0 [shape = 'u32[]', space=smem, size = 0x4, offset = 0x4, fixed_abs, tag = 'smem constant byte address 0x4 - core index']
  #allocation1 [shape = 'u32[144,128]{1,0:T(1,128)}', space=vmem, size = 0x12000, scoped, tag = 'internal scratch']
  #allocation2 [shape = 'f32[256,1]{1,0:T(8,128)}', space=vmem, size = 0x20000, scoped, tag = 'scratch operand']
  #allocation3 [shape = 'f32[256,1]{1,0:T(8,128)}', space=vmem, size = 0x20000, scoped, tag = 'scratch operand']
  #allocation4 [shape = 'f32[256,128]{1,0:T(8,128)}', space=vmem, size = 0x20000, scoped, tag = 'scratch operand']
  %s0 = inlined_call_operand.hbm [shape: bf16[256,128], index: 0, kind: input, shape index: {}]
  %s1 = inlined_call_operand.hbm [shape: f32[1,256], index: 1, kind: input, shape index: {}]
  %s2 = inlined_call_operand.hbm [shape: f32[256,1], index: 2, kind: input, shape index: {}]
  %s3 = inlined_call_operand.hbm [shape: f32[1,128], index: 3, kind: input, shape index: {}]
  %s4 = inlined_call_operand.hbm [shape: s8[256,256], index: 4, kind: input, shape index: {}]
  %s5 = inlined_call_operand.hbm [shape: f32[256,128], index: 5, kind: output, shape index: {}]
  %s6 = sld [smem:[#allocation0]]
  $region58: #{tpu_custom_call.1} parent=0
    _
  %s8 = ssub.s32 1, %s6
  %s9 = scalar_select 0, %s8, %s6
  $region1: #{tpu_custom_call.1} parent=0
    #allocation5 [shape = 'u8[65536]{0}', space=vmem, size = 0x10000, scoped, tag = 'input window, operand 0, single buffered']
    #allocation6 [shape = 's32[1]{0}', space=sflag, size = 0x4, scoped, tag = 'scoped memory for tpu_custom_call.1']
    #allocation7 [shape = 's32[1]{0}', space=sflag, size = 0x4, scoped, tag = 'scoped memory for tpu_custom_call.1']
    #allocation8 [shape = 'u8[1024]{0}', space=vmem, size = 0x400, scoped, tag = 'input window, operand 1, single buffered']
    #allocation9 [shape = 's32[1]{0}', space=sflag, size = 0x4, scoped, tag = 'scoped memory for tpu_custom_call.1']
    #allocation10 [shape = 'u8[131072]{0}', space=vmem, size = 0x20000, scoped, tag = 'input window, operand 2, single buffered']
    #allocation11 [shape = 'u8[512]{0}', space=vmem, size = 0x400, scoped, tag = 'input window, operand 3, single buffered']
    #allocation12 [shape = 's32[1]{0}', space=sflag, size = 0x4, scoped, tag = 'scoped memory for tpu_custom_call.1']
    #allocation13 [shape = 'u8[65536]{0}', space=vmem, size = 0x10000, scoped, tag = 'input window, operand 4, single buffered']
    #allocation14 [shape = 'u8[131072]{0}', space=vmem, size = 0x20000, scoped, tag = 'output window, operand 0, single buffered']
    %10 = vsyncpa [#allocation6], 0
    %11 = vsyncpa [#allocation9], 0
    %12 = vsyncpa [#allocation12], 0
    %13 = vsyncpa [#allocation7], 0
    // Predicated region
    $region2: #{tpu_custom_call.1} parent=1 // pred_check
      _
    $region3: #{tpu_custom_call.1} parent=1 // pred_check_branch
      %15 = sbr.rel (0) target = $region5
    $region4: #{tpu_custom_call.1} parent=1 // pred_region
      %s17 = ssub.s32 2048, 2048
      %18 = vsyncadd [#allocation6], %s17
      %s19 = sshll.u32 [#allocation5], 4
      %s20 = int_to_ptr.vmem [resolvable:$true] %s19
      %25 = dma.hbm_to_vmem [thread:$0]  %s0, 2048, %s20, [#allocation6], 64, 64, 4
    $region5: #{tpu_custom_call.1} parent=1 // pred_fallthru
      _
    // Predicated region
    $region6: #{tpu_custom_call.1} parent=1 // pred_check
      _
    $region7: #{tpu_custom_call.1} parent=1 // pred_check_branch
      %27 = sbr.rel (0) target = $region9
    $region8: #{tpu_custom_call.1} parent=1 // pred_region
      %s29 = ssub.s32 32, 32
      %30 = vsyncadd [#allocation9], %s29
      %s32 = sshll.u32 [#allocation8], 4
      %s33 = int_to_ptr.vmem [resolvable:$true] %s32
      %35 = dma.hbm_to_vmem [thread:$0]  %s1, 32, %s33, [#allocation9]
    $region9: #{tpu_custom_call.1} parent=1 // pred_fallthru
      _
    // Predicated region
    $region10: #{tpu_custom_call.1} parent=1 // pred_check
      _
    $region11: #{tpu_custom_call.1} parent=1 // pred_check_branch
      %37 = sbr.rel (0) target = $region13
    $region12: #{tpu_custom_call.1} parent=1 // pred_region
      %s39 = ssub.s32 4096, 4096
      %40 = vsyncadd [#allocation9], %s39
      %s41 = sshll.u32 [#allocation10], 4
      %s42 = int_to_ptr.vmem [resolvable:$true] %s41
      %47 = dma.hbm_to_vmem [thread:$0]  %s2, 4096, %s42, [#allocation9], 128, 128, 8
    $region13: #{tpu_custom_call.1} parent=1 // pred_fallthru
      _
    // Predicated region
    $region14: #{tpu_custom_call.1} parent=1 // pred_check
      _
    $region15: #{tpu_custom_call.1} parent=1 // pred_check_branch
      %49 = sbr.rel (0) target = $region17
    $region16: #{tpu_custom_call.1} parent=1 // pred_region
      %s51 = ssub.s32 16, 16
      %52 = vsyncadd [#allocation12], %s51
      %s54 = sshll.u32 [#allocation11], 4
      %s55 = int_to_ptr.vmem [resolvable:$true] %s54
      %57 = dma.hbm_to_vmem [thread:$0]  %s3, 16, %s55, [#allocation12]
    $region17: #{tpu_custom_call.1} parent=1 // pred_fallthru
      _
    // Predicated region
    $region18: #{tpu_custom_call.1} parent=1 // pred_check
      _
    $region19: #{tpu_custom_call.1} parent=1 // pred_check_branch
      %59 = sbr.rel (0) target = $region21
    $region20: #{tpu_custom_call.1} parent=1 // pred_region
      %s61 = ssub.s32 2048, 2048
      %62 = vsyncadd [#allocation12], %s61
      %s63 = sshll.u32 [#allocation13], 4
      %s64 = int_to_ptr.vmem [resolvable:$true] %s63
      %69 = dma.hbm_to_vmem [thread:$0]  %s4, 2048, %s64, [#allocation12], 256, 256, 16
    $region21: #{tpu_custom_call.1} parent=1 // pred_fallthru
      _
    // Predicated region
    $region22: #{tpu_custom_call.1} parent=1 // pred_check
      _
    $region23: #{tpu_custom_call.1} parent=1 // pred_check_branch
      %71 = sbr.rel (0) target = $region25
    $region24: #{tpu_custom_call.1} parent=1 // pred_region
      %72 = dma.done [#allocation6], 2048
    $region25: #{tpu_custom_call.1} parent=1 // pred_fallthru
      _
    // Predicated region
    $region26: #{tpu_custom_call.1} parent=1 // pred_check
      _
    $region27: #{tpu_custom_call.1} parent=1 // pred_check_branch
      %74 = sbr.rel (0) target = $region29
    $region28: #{tpu_custom_call.1} parent=1 // pred_region
      %75 = dma.done [#allocation9], 32
    $region29: #{tpu_custom_call.1} parent=1 // pred_fallthru
      _
    // Predicated region
    $region30: #{tpu_custom_call.1} parent=1 // pred_check
      _
    $region31: #{tpu_custom_call.1} parent=1 // pred_check_branch
      %77 = sbr.rel (0) target = $region33
    $region32: #{tpu_custom_call.1} parent=1 // pred_region
      %78 = dma.done [#allocation9], 4096
    $region33: #{tpu_custom_call.1} parent=1 // pred_fallthru
      _
    // Predicated region
    $region34: #{tpu_custom_call.1} parent=1 // pred_check
      _
    $region35: #{tpu_custom_call.1} parent=1 // pred_check_branch
      %80 = sbr.rel (0) target = $region37
    $region36: #{tpu_custom_call.1} parent=1 // pred_region
      %81 = dma.done [#allocation12], 16
    $region37: #{tpu_custom_call.1} parent=1 // pred_fallthru
      _
    // Predicated region
    $region38: #{tpu_custom_call.1} parent=1 // pred_check
      _
    $region39: #{tpu_custom_call.1} parent=1 // pred_check_branch
      %83 = sbr.rel (0) target = $region41
    $region40: #{tpu_custom_call.1} parent=1 // pred_region
      %84 = dma.done [#allocation12], 2048
    $region41: #{tpu_custom_call.1} parent=1 // pred_fallthru
      _
    %p86 = scmp.eq.s32.totalorder 0, 0
    // Predicated region
    $region42: #{tpu_custom_call.1} parent=1 // pred_check
      %p87 = pneg %p86
    $region43: #{tpu_custom_call.1} parent=1 // pred_check_branch
      %89 = sbr.rel (%p87) target = $region45
    $region44: #{tpu_custom_call.1} parent=1 // pred_region
      %vm90 = vcmask 7168
      %91 = vst.msk [vmem:[#allocation2] sm:$0xff] %vm90, -inf
      %92 = vst.msk [vmem:[#allocation2 + $0x8] sm:$0xff] %vm90, -inf
      %93 = vst.msk [vmem:[#allocation2 + $0x10] sm:$0xff] %vm90, -inf
      %94 = vst.msk [vmem:[#allocation2 + $0x18] sm:$0xff] %vm90, -inf
      %95 = vst.msk [vmem:[#allocation2 + $0x20] sm:$0xff] %vm90, -inf
      %96 = vst.msk [vmem:[#allocation2 + $0x28] sm:$0xff] %vm90, -inf
      %97 = vst.msk [vmem:[#allocation2 + $0x30] sm:$0xff] %vm90, -inf
      %98 = vst.msk [vmem:[#allocation2 + $0x38] sm:$0xff] %vm90, -inf
      %99 = vst.msk [vmem:[#allocation2 + $0x40] sm:$0xff] %vm90, -inf
      %100 = vst.msk [vmem:[#allocation2 + $0x48] sm:$0xff] %vm90, -inf
      %101 = vst.msk [vmem:[#allocation2 + $0x50] sm:$0xff] %vm90, -inf
      %102 = vst.msk [vmem:[#allocation2 + $0x58] sm:$0xff] %vm90, -inf
      %103 = vst.msk [vmem:[#allocation2 + $0x60] sm:$0xff] %vm90, -inf
      %104 = vst.msk [vmem:[#allocation2 + $0x68] sm:$0xff] %vm90, -inf
      %105 = vst.msk [vmem:[#allocation2 + $0x70] sm:$0xff] %vm90, -inf
      %106 = vst.msk [vmem:[#allocation2 + $0x78] sm:$0xff] %vm90, -inf
      %107 = vst.msk [vmem:[#allocation2 + $0x80] sm:$0xff] %vm90, -inf
      %108 = vst.msk [vmem:[#allocation2 + $0x88] sm:$0xff] %vm90, -inf
      %109 = vst.msk [vmem:[#allocation2 + $0x90] sm:$0xff] %vm90, -inf
      %110 = vst.msk [vmem:[#allocation2 + $0x98] sm:$0xff] %vm90, -inf
      %111 = vst.msk [vmem:[#allocation2 + $0xa0] sm:$0xff] %vm90, -inf
      %112 = vst.msk [vmem:[#allocation2 + $0xa8] sm:$0xff] %vm90, -inf
      %113 = vst.msk [vmem:[#allocation2 + $0xb0] sm:$0xff] %vm90, -inf
      %114 = vst.msk [vmem:[#allocation2 + $0xb8] sm:$0xff] %vm90, -inf
      %115 = vst.msk [vmem:[#allocation2 + $0xc0] sm:$0xff] %vm90, -inf
      %116 = vst.msk [vmem:[#allocation2 + $0xc8] sm:$0xff] %vm90, -inf
      %117 = vst.msk [vmem:[#allocation2 + $0xd0] sm:$0xff] %vm90, -inf
      %118 = vst.msk [vmem:[#allocation2 + $0xd8] sm:$0xff] %vm90, -inf
      %119 = vst.msk [vmem:[#allocation2 + $0xe0] sm:$0xff] %vm90, -inf
      %120 = vst.msk [vmem:[#allocation2 + $0xe8] sm:$0xff] %vm90, -inf
      %121 = vst.msk [vmem:[#allocation2 + $0xf0] sm:$0xff] %vm90, -inf
      %122 = vst.msk [vmem:[#allocation2 + $0xf8] sm:$0xff] %vm90, -inf
      %123 = vst.msk [vmem:[#allocation3] sm:$0xff] %vm90, 0.0
      %124 = vst.msk [vmem:[#allocation3 + $0x8] sm:$0xff] %vm90, 0.0
      %125 = vst.msk [vmem:[#allocation3 + $0x10] sm:$0xff] %vm90, 0.0
      %126 = vst.msk [vmem:[#allocation3 + $0x18] sm:$0xff] %vm90, 0.0
      %127 = vst.msk [vmem:[#allocation3 + $0x20] sm:$0xff] %vm90, 0.0
      %128 = vst.msk [vmem:[#allocation3 + $0x28] sm:$0xff] %vm90, 0.0
      %129 = vst.msk [vmem:[#allocation3 + $0x30] sm:$0xff] %vm90, 0.0
      %130 = vst.msk [vmem:[#allocation3 + $0x38] sm:$0xff] %vm90, 0.0
      %131 = vst.msk [vmem:[#allocation3 + $0x40] sm:$0xff] %vm90, 0.0
      %132 = vst.msk [vmem:[#allocation3 + $0x48] sm:$0xff] %vm90, 0.0
      %133 = vst.msk [vmem:[#allocation3 + $0x50] sm:$0xff] %vm90, 0.0
      %134 = vst.msk [vmem:[#allocation3 + $0x58] sm:$0xff] %vm90, 0.0
      %135 = vst.msk [vmem:[#allocation3 + $0x60] sm:$0xff] %vm90, 0.0
      %136 = vst.msk [vmem:[#allocation3 + $0x68] sm:$0xff] %vm90, 0.0
      %137 = vst.msk [vmem:[#allocation3 + $0x70] sm:$0xff] %vm90, 0.0
      %138 = vst.msk [vmem:[#allocation3 + $0x78] sm:$0xff] %vm90, 0.0
      %139 = vst.msk [vmem:[#allocation3 + $0x80] sm:$0xff] %vm90, 0.0
      %140 = vst.msk [vmem:[#allocation3 + $0x88] sm:$0xff] %vm90, 0.0
      %141 = vst.msk [vmem:[#allocation3 + $0x90] sm:$0xff] %vm90, 0.0
      %142 = vst.msk [vmem:[#allocation3 + $0x98] sm:$0xff] %vm90, 0.0
      %143 = vst.msk [vmem:[#allocation3 + $0xa0] sm:$0xff] %vm90, 0.0
      %144 = vst.msk [vmem:[#allocation3 + $0xa8] sm:$0xff] %vm90, 0.0
      %145 = vst.msk [vmem:[#allocation3 + $0xb0] sm:$0xff] %vm90, 0.0
      %146 = vst.msk [vmem:[#allocation3 + $0xb8] sm:$0xff] %vm90, 0.0
      %147 = vst.msk [vmem:[#allocation3 + $0xc0] sm:$0xff] %vm90, 0.0
      %148 = vst.msk [vmem:[#allocation3 + $0xc8] sm:$0xff] %vm90, 0.0
      %149 = vst.msk [vmem:[#allocation3 + $0xd0] sm:$0xff] %vm90, 0.0
      %150 = vst.msk [vmem:[#allocation3 + $0xd8] sm:$0xff] %vm90, 0.0
      %151 = vst.msk [vmem:[#allocation3 + $0xe0] sm:$0xff] %vm90, 0.0
      %152 = vst.msk [vmem:[#allocation3 + $0xe8] sm:$0xff] %vm90, 0.0
      %153 = vst.msk [vmem:[#allocation3 + $0xf0] sm:$0xff] %vm90, 0.0
      %154 = vst.msk [vmem:[#allocation3 + $0xf8] sm:$0xff] %vm90, 0.0
      %155 = vst [vmem:[#allocation4] sm:$0xff] 0.0
      %156 = vst [vmem:[#allocation4 + $0x8] sm:$0xff] 0.0
      %157 = vst [vmem:[#allocation4 + $0x10] sm:$0xff] 0.0
      %158 = vst [vmem:[#allocation4 + $0x18] sm:$0xff] 0.0
      %159 = vst [vmem:[#allocation4 + $0x20] sm:$0xff] 0.0
      %160 = vst [vmem:[#allocation4 + $0x28] sm:$0xff] 0.0
      %161 = vst [vmem:[#allocation4 + $0x30] sm:$0xff] 0.0
      %162 = vst [vmem:[#allocation4 + $0x38] sm:$0xff] 0.0
      %163 = vst [vmem:[#allocation4 + $0x40] sm:$0xff] 0.0
      %164 = vst [vmem:[#allocation4 + $0x48] sm:$0xff] 0.0
      %165 = vst [vmem:[#allocation4 + $0x50] sm:$0xff] 0.0
      %166 = vst [vmem:[#allocation4 + $0x58] sm:$0xff] 0.0
      %167 = vst [vmem:[#allocation4 + $0x60] sm:$0xff] 0.0
      %168 = vst [vmem:[#allocation4 + $0x68] sm:$0xff] 0.0
      %169 = vst [vmem:[#allocation4 + $0x70] sm:$0xff] 0.0
      %170 = vst [vmem:[#allocation4 + $0x78] sm:$0xff] 0.0
      %171 = vst [vmem:[#allocation4 + $0x80] sm:$0xff] 0.0
      %172 = vst [vmem:[#allocation4 + $0x88] sm:$0xff] 0.0
      %173 = vst [vmem:[#allocation4 + $0x90] sm:$0xff] 0.0
      %174 = vst [vmem:[#allocation4 + $0x98] sm:$0xff] 0.0
      %175 = vst [vmem:[#allocation4 + $0xa0] sm:$0xff] 0.0
      %176 = vst [vmem:[#allocation4 + $0xa8] sm:$0xff] 0.0
      %177 = vst [vmem:[#allocation4 + $0xb0] sm:$0xff] 0.0
      %178 = vst [vmem:[#allocation4 + $0xb8] sm:$0xff] 0.0
      %179 = vst [vmem:[#allocation4 + $0xc0] sm:$0xff] 0.0
      %180 = vst [vmem:[#allocation4 + $0xc8] sm:$0xff] 0.0
      %181 = vst [vmem:[#allocation4 + $0xd0] sm:$0xff] 0.0
      %182 = vst [vmem:[#allocation4 + $0xd8] sm:$0xff] 0.0
      %183 = vst [vmem:[#allocation4 + $0xe0] sm:$0xff] 0.0
      %184 = vst [vmem:[#allocation4 + $0xe8] sm:$0xff] 0.0
      %185 = vst [vmem:[#allocation4 + $0xf0] sm:$0xff] 0.0
      %186 = vst [vmem:[#allocation4 + $0xf8] sm:$0xff] 0.0
    $region45: #{tpu_custom_call.1} parent=1 // pred_fallthru
      _
    %v187 = vld [vmem:[#allocation10] sm:$0xff]
    %v188 = vld [vmem:[#allocation10 + $0x8] sm:$0xff]
    %v189 = vld [vmem:[#allocation10 + $0x10] sm:$0xff]
    %v190 = vld [vmem:[#allocation10 + $0x18] sm:$0xff]
    %v191 = vld [vmem:[#allocation10 + $0x20] sm:$0xff]
    %v192 = vld [vmem:[#allocation10 + $0x28] sm:$0xff]
    %v193 = vld [vmem:[#allocation10 + $0x30] sm:$0xff]
    %v194 = vld [vmem:[#allocation10 + $0x38] sm:$0xff]
    %v195 = vld [vmem:[#allocation10 + $0x40] sm:$0xff]
    %v196 = vld [vmem:[#allocation10 + $0x48] sm:$0xff]
    %v197 = vld [vmem:[#allocation10 + $0x50] sm:$0xff]
    %v198 = vld [vmem:[#allocation10 + $0x58] sm:$0xff]
    %v199 = vld [vmem:[#allocation10 + $0x60] sm:$0xff]
    %v200 = vld [vmem:[#allocation10 + $0x68] sm:$0xff]
    %v201 = vld [vmem:[#allocation10 + $0x70] sm:$0xff]
    %v202 = vld [vmem:[#allocation10 + $0x78] sm:$0xff]
    %v203 = vld [vmem:[#allocation10 + $0x80] sm:$0xff]
    %v204 = vld [vmem:[#allocation10 + $0x88] sm:$0xff]
    %v205 = vld [vmem:[#allocation10 + $0x90] sm:$0xff]
    %v206 = vld [vmem:[#allocation10 + $0x98] sm:$0xff]
    %v207 = vld [vmem:[#allocation10 + $0xa0] sm:$0xff]
    %v208 = vld [vmem:[#allocation10 + $0xa8] sm:$0xff]
    %v209 = vld [vmem:[#allocation10 + $0xb0] sm:$0xff]
    %v210 = vld [vmem:[#allocation10 + $0xb8] sm:$0xff]
    %v211 = vld [vmem:[#allocation10 + $0xc0] sm:$0xff]
    %v212 = vld [vmem:[#allocation10 + $0xc8] sm:$0xff]
    %v213 = vld [vmem:[#allocation10 + $0xd0] sm:$0xff]
    %v214 = vld [vmem:[#allocation10 + $0xd8] sm:$0xff]
    %v215 = vld [vmem:[#allocation10 + $0xe0] sm:$0xff]
    %v216 = vld [vmem:[#allocation10 + $0xe8] sm:$0xff]
    %v217 = vld [vmem:[#allocation10 + $0xf0] sm:$0xff]
    %v218 = vld [vmem:[#allocation10 + $0xf8] sm:$0xff]
    %v219 = vld [vmem:[#allocation8] sm:$0x3]
    %221 = vset.pattern.permute.xlu0 0
    %222 = vperm.xlu0 %221, %v187
    %v223 = vpop.permute.xlu0 %222
    %226 = vset.pattern.permute.xlu0 0
    %227 = vperm.xlu0 %226, %v188
    %v228 = vpop.permute.xlu0 %227
    %231 = vset.pattern.permute.xlu0 0
    %232 = vperm.xlu0 %231, %v189
    %v233 = vpop.permute.xlu0 %232
    %236 = vset.pattern.permute.xlu0 0
    %237 = vperm.xlu0 %236, %v190
    %v238 = vpop.permute.xlu0 %237
    %241 = vset.pattern.permute.xlu0 0
    %242 = vperm.xlu0 %241, %v191
    %v243 = vpop.permute.xlu0 %242
    %246 = vset.pattern.permute.xlu0 0
    %247 = vperm.xlu0 %246, %v192
    %v248 = vpop.permute.xlu0 %247
    %251 = vset.pattern.permute.xlu0 0
    %252 = vperm.xlu0 %251, %v193
    %v253 = vpop.permute.xlu0 %252
    %256 = vset.pattern.permute.xlu0 0
    %257 = vperm.xlu0 %256, %v194
    %v258 = vpop.permute.xlu0 %257
    %261 = vset.pattern.permute.xlu0 0
    %262 = vperm.xlu0 %261, %v195
    %v263 = vpop.permute.xlu0 %262
    %266 = vset.pattern.permute.xlu0 0
    %267 = vperm.xlu0 %266, %v196
    %v268 = vpop.permute.xlu0 %267
    %271 = vset.pattern.permute.xlu0 0
    %272 = vperm.xlu0 %271, %v197
    %v273 = vpop.permute.xlu0 %272
    %276 = vset.pattern.permute.xlu0 0
    %277 = vperm.xlu0 %276, %v198
    %v278 = vpop.permute.xlu0 %277
    %281 = vset.pattern.permute.xlu0 0
    %282 = vperm.xlu0 %281, %v199
    %v283 = vpop.permute.xlu0 %282
    %286 = vset.pattern.permute.xlu0 0
    %287 = vperm.xlu0 %286, %v200
    %v288 = vpop.permute.xlu0 %287
    %291 = vset.pattern.permute.xlu0 0
    %292 = vperm.xlu0 %291, %v201
    %v293 = vpop.permute.xlu0 %292
    %296 = vset.pattern.permute.xlu0 0
    %297 = vperm.xlu0 %296, %v202
    %v298 = vpop.permute.xlu0 %297
    %301 = vset.pattern.permute.xlu0 0
    %302 = vperm.xlu0 %301, %v203
    %v303 = vpop.permute.xlu0 %302
    %306 = vset.pattern.permute.xlu0 0
    %307 = vperm.xlu0 %306, %v204
    %v308 = vpop.permute.xlu0 %307
    %311 = vset.pattern.permute.xlu0 0
    %312 = vperm.xlu0 %311, %v205
    %v313 = vpop.permute.xlu0 %312
    %316 = vset.pattern.permute.xlu0 0
    %317 = vperm.xlu0 %316, %v206
    %v318 = vpop.permute.xlu0 %317
    %321 = vset.pattern.permute.xlu0 0
    %322 = vperm.xlu0 %321, %v207
    %v323 = vpop.permute.xlu0 %322
    %326 = vset.pattern.permute.xlu0 0
    %327 = vperm.xlu0 %326, %v208
    %v328 = vpop.permute.xlu0 %327
    %331 = vset.pattern.permute.xlu0 0
    %332 = vperm.xlu0 %331, %v209
    %v333 = vpop.permute.xlu0 %332
    %336 = vset.pattern.permute.xlu0 0
    %337 = vperm.xlu0 %336, %v210
    %v338 = vpop.permute.xlu0 %337
    %341 = vset.pattern.permute.xlu0 0
    %342 = vperm.xlu0 %341, %v211
    %v343 = vpop.permute.xlu0 %342
    %346 = vset.pattern.permute.xlu0 0
    %347 = vperm.xlu0 %346, %v212
    %v348 = vpop.permute.xlu0 %347
    %351 = vset.pattern.permute.xlu0 0
    %352 = vperm.xlu0 %351, %v213
    %v353 = vpop.permute.xlu0 %352
    %356 = vset.pattern.permute.xlu0 0
    %357 = vperm.xlu0 %356, %v214
    %v358 = vpop.permute.xlu0 %357
    %361 = vset.pattern.permute.xlu0 0
    %362 = vperm.xlu0 %361, %v215
    %v363 = vpop.permute.xlu0 %362
    %366 = vset.pattern.permute.xlu0 0
    %367 = vperm.xlu0 %366, %v216
    %v368 = vpop.permute.xlu0 %367
    %371 = vset.pattern.permute.xlu0 0
    %372 = vperm.xlu0 %371, %v217
    %v373 = vpop.permute.xlu0 %372
    %376 = vset.pattern.permute.xlu0 0
    %377 = vperm.xlu0 %376, %v218
    %v378 = vpop.permute.xlu0 %377
    %v381 = vlaneseq
    %v382 = vshrl.u32 %v381, 7
    %v383 = vsub.s32 0, %v382
    %v384 = vrot.slane %v219, %v383
    %v385 = vlaneseq
    %v386 = vshrl.u32 %v385, 7
    %v387 = vsub.s32 1, %v386
    %v388 = vrot.slane %v219, %v387
    %v391 = vadd.f32 %v223, %v384
    %v392 = vadd.f32 %v223, %v388
    %v393 = vadd.f32 %v228, %v384
    %v394 = vadd.f32 %v228, %v388
    %v395 = vadd.f32 %v233, %v384
    %v396 = vadd.f32 %v233, %v388
    %v397 = vadd.f32 %v238, %v384
    %v398 = vadd.f32 %v238, %v388
    %v399 = vadd.f32 %v243, %v384
    %v400 = vadd.f32 %v243, %v388
    %v401 = vadd.f32 %v248, %v384
    %v402 = vadd.f32 %v248, %v388
    %v403 = vadd.f32 %v253, %v384
    %v404 = vadd.f32 %v253, %v388
    %v405 = vadd.f32 %v258, %v384
    %v406 = vadd.f32 %v258, %v388
    %v407 = vadd.f32 %v263, %v384
    %v408 = vadd.f32 %v263, %v388
    %v409 = vadd.f32 %v268, %v384
    %v410 = vadd.f32 %v268, %v388
    %v411 = vadd.f32 %v273, %v384
    %v412 = vadd.f32 %v273, %v388
    %v413 = vadd.f32 %v278, %v384
    %v414 = vadd.f32 %v278, %v388
    %v415 = vadd.f32 %v283, %v384
    %v416 = vadd.f32 %v283, %v388
    %v417 = vadd.f32 %v288, %v384
    %v418 = vadd.f32 %v288, %v388
    %v419 = vadd.f32 %v293, %v384
    %v420 = vadd.f32 %v293, %v388
    %v421 = vadd.f32 %v298, %v384
    %v422 = vadd.f32 %v298, %v388
    %v423 = vadd.f32 %v303, %v384
    %v424 = vadd.f32 %v303, %v388
    %v425 = vadd.f32 %v308, %v384
    %v426 = vadd.f32 %v308, %v388
    %v427 = vadd.f32 %v313, %v384
    %v428 = vadd.f32 %v313, %v388
    %v429 = vadd.f32 %v318, %v384
    %v430 = vadd.f32 %v318, %v388
    %v431 = vadd.f32 %v323, %v384
    %v432 = vadd.f32 %v323, %v388
    %v433 = vadd.f32 %v328, %v384
    %v434 = vadd.f32 %v328, %v388
    %v435 = vadd.f32 %v333, %v384
    %v436 = vadd.f32 %v333, %v388
    %v437 = vadd.f32 %v338, %v384
    %v438 = vadd.f32 %v338, %v388
    %v439 = vadd.f32 %v343, %v384
    %v440 = vadd.f32 %v343, %v388
    %v441 = vadd.f32 %v348, %v384
    %v442 = vadd.f32 %v348, %v388
    %v443 = vadd.f32 %v353, %v384
    %v444 = vadd.f32 %v353, %v388
    %v445 = vadd.f32 %v358, %v384
    %v446 = vadd.f32 %v358, %v388
    %v447 = vadd.f32 %v363, %v384
    %v448 = vadd.f32 %v363, %v388
    %v449 = vadd.f32 %v368, %v384
    %v450 = vadd.f32 %v368, %v388
    %v451 = vadd.f32 %v373, %v384
    %v452 = vadd.f32 %v373, %v388
    %v453 = vadd.f32 %v378, %v384
    %v454 = vadd.f32 %v378, %v388
    %vm455 = vcmp.gt.f32.partialorder %v391, 0.0
    %vm456 = vcmp.gt.f32.partialorder %v392, 0.0
    %vm457 = vcmp.gt.f32.partialorder %v393, 0.0
    %vm458 = vcmp.gt.f32.partialorder %v394, 0.0
    %vm459 = vcmp.gt.f32.partialorder %v395, 0.0
    %vm460 = vcmp.gt.f32.partialorder %v396, 0.0
    %vm461 = vcmp.gt.f32.partialorder %v397, 0.0
    %vm462 = vcmp.gt.f32.partialorder %v398, 0.0
    %vm463 = vcmp.gt.f32.partialorder %v399, 0.0
    %vm464 = vcmp.gt.f32.partialorder %v400, 0.0
    %vm465 = vcmp.gt.f32.partialorder %v401, 0.0
    %vm466 = vcmp.gt.f32.partialorder %v402, 0.0
    %vm467 = vcmp.gt.f32.partialorder %v403, 0.0
    %vm468 = vcmp.gt.f32.partialorder %v404, 0.0
    %vm469 = vcmp.gt.f32.partialorder %v405, 0.0
    %vm470 = vcmp.gt.f32.partialorder %v406, 0.0
    %vm471 = vcmp.gt.f32.partialorder %v407, 0.0
    %vm472 = vcmp.gt.f32.partialorder %v408, 0.0
    %vm473 = vcmp.gt.f32.partialorder %v409, 0.0
    %vm474 = vcmp.gt.f32.partialorder %v410, 0.0
    %vm475 = vcmp.gt.f32.partialorder %v411, 0.0
    %vm476 = vcmp.gt.f32.partialorder %v412, 0.0
    %vm477 = vcmp.gt.f32.partialorder %v413, 0.0
    %vm478 = vcmp.gt.f32.partialorder %v414, 0.0
    %vm479 = vcmp.gt.f32.partialorder %v415, 0.0
    %vm480 = vcmp.gt.f32.partialorder %v416, 0.0
    %vm481 = vcmp.gt.f32.partialorder %v417, 0.0
    %vm482 = vcmp.gt.f32.partialorder %v418, 0.0
    %vm483 = vcmp.gt.f32.partialorder %v419, 0.0
    %vm484 = vcmp.gt.f32.partialorder %v420, 0.0
    %vm485 = vcmp.gt.f32.partialorder %v421, 0.0
    %vm486 = vcmp.gt.f32.partialorder %v422, 0.0
    %vm487 = vcmp.gt.f32.partialorder %v423, 0.0
    %vm488 = vcmp.gt.f32.partialorder %v424, 0.0
    %vm489 = vcmp.gt.f32.partialorder %v425, 0.0
    %vm490 = vcmp.gt.f32.partialorder %v426, 0.0
    %vm491 = vcmp.gt.f32.partialorder %v427, 0.0
    %vm492 = vcmp.gt.f32.partialorder %v428, 0.0
    %vm493 = vcmp.gt.f32.partialorder %v429, 0.0
    %vm494 = vcmp.gt.f32.partialorder %v430, 0.0
    %vm495 = vcmp.gt.f32.partialorder %v431, 0.0
    %vm496 = vcmp.gt.f32.partialorder %v432, 0.0
    %vm497 = vcmp.gt.f32.partialorder %v433, 0.0
    %vm498 = vcmp.gt.f32.partialorder %v434, 0.0
    %vm499 = vcmp.gt.f32.partialorder %v435, 0.0
    %vm500 = vcmp.gt.f32.partialorder %v436, 0.0
    %vm501 = vcmp.gt.f32.partialorder %v437, 0.0
    %vm502 = vcmp.gt.f32.partialorder %v438, 0.0
    %vm503 = vcmp.gt.f32.partialorder %v439, 0.0
    %vm504 = vcmp.gt.f32.partialorder %v440, 0.0
    %vm505 = vcmp.gt.f32.partialorder %v441, 0.0
    %vm506 = vcmp.gt.f32.partialorder %v442, 0.0
    %vm507 = vcmp.gt.f32.partialorder %v443, 0.0
    %vm508 = vcmp.gt.f32.partialorder %v444, 0.0
    %vm509 = vcmp.gt.f32.partialorder %v445, 0.0
    %vm510 = vcmp.gt.f32.partialorder %v446, 0.0
    %vm511 = vcmp.gt.f32.partialorder %v447, 0.0
    %vm512 = vcmp.gt.f32.partialorder %v448, 0.0
    %vm513 = vcmp.gt.f32.partialorder %v449, 0.0
    %vm514 = vcmp.gt.f32.partialorder %v450, 0.0
    %vm515 = vcmp.gt.f32.partialorder %v451, 0.0
    %vm516 = vcmp.gt.f32.partialorder %v452, 0.0
    %vm517 = vcmp.gt.f32.partialorder %v453, 0.0
    %vm518 = vcmp.gt.f32.partialorder %v454, 0.0
    %v519 = vmul.f32 %v391, 0.2
    %v520 = vmul.f32 %v392, 0.2
    %v521 = vmul.f32 %v393, 0.2
    %v522 = vmul.f32 %v394, 0.2
    %v523 = vmul.f32 %v395, 0.2
    %v524 = vmul.f32 %v396, 0.2
    %v525 = vmul.f32 %v397, 0.2
    %v526 = vmul.f32 %v398, 0.2
    %v527 = vmul.f32 %v399, 0.2
    %v528 = vmul.f32 %v400, 0.2
    %v529 = vmul.f32 %v401, 0.2
    %v530 = vmul.f32 %v402, 0.2
    %v531 = vmul.f32 %v403, 0.2
    %v532 = vmul.f32 %v404, 0.2
    %v533 = vmul.f32 %v405, 0.2
    %v534 = vmul.f32 %v406, 0.2
    %v535 = vmul.f32 %v407, 0.2
    %v536 = vmul.f32 %v408, 0.2
    %v537 = vmul.f32 %v409, 0.2
    %v538 = vmul.f32 %v410, 0.2
    %v539 = vmul.f32 %v411, 0.2
    %v540 = vmul.f32 %v412, 0.2
    %v541 = vmul.f32 %v413, 0.2
    %v542 = vmul.f32 %v414, 0.2
    %v543 = vmul.f32 %v415, 0.2
    %v544 = vmul.f32 %v416, 0.2
    %v545 = vmul.f32 %v417, 0.2
    %v546 = vmul.f32 %v418, 0.2
    %v547 = vmul.f32 %v419, 0.2
    %v548 = vmul.f32 %v420, 0.2
    %v549 = vmul.f32 %v421, 0.2
    %v550 = vmul.f32 %v422, 0.2
    %v551 = vmul.f32 %v423, 0.2
    %v552 = vmul.f32 %v424, 0.2
    %v553 = vmul.f32 %v425, 0.2
    %v554 = vmul.f32 %v426, 0.2
    %v555 = vmul.f32 %v427, 0.2
    %v556 = vmul.f32 %v428, 0.2
    %v557 = vmul.f32 %v429, 0.2
    %v558 = vmul.f32 %v430, 0.2
    %v559 = vmul.f32 %v431, 0.2
    %v560 = vmul.f32 %v432, 0.2
    %v561 = vmul.f32 %v433, 0.2
    %v562 = vmul.f32 %v434, 0.2
    %v563 = vmul.f32 %v435, 0.2
    %v564 = vmul.f32 %v436, 0.2
    %v565 = vmul.f32 %v437, 0.2
    %v566 = vmul.f32 %v438, 0.2
    %v567 = vmul.f32 %v439, 0.2
    %v568 = vmul.f32 %v440, 0.2
    %v569 = vmul.f32 %v441, 0.2
    %v570 = vmul.f32 %v442, 0.2
    %v571 = vmul.f32 %v443, 0.2
    %v572 = vmul.f32 %v444, 0.2
    %v573 = vmul.f32 %v445, 0.2
    %v574 = vmul.f32 %v446, 0.2
    %v575 = vmul.f32 %v447, 0.2
    %v576 = vmul.f32 %v448, 0.2
    %v577 = vmul.f32 %v449, 0.2
    %v578 = vmul.f32 %v450, 0.2
    %v579 = vmul.f32 %v451, 0.2
    %v580 = vmul.f32 %v452, 0.2
    %v581 = vmul.f32 %v453, 0.2
    %v582 = vmul.f32 %v454, 0.2
    %v583 = vsel %vm455, %v391, %v519
    %v584 = vsel %vm456, %v392, %v520
    %v585 = vsel %vm457, %v393, %v521
    %v586 = vsel %vm458, %v394, %v522
    %v587 = vsel %vm459, %v395, %v523
    %v588 = vsel %vm460, %v396, %v524
    %v589 = vsel %vm461, %v397, %v525
    %v590 = vsel %vm462, %v398, %v526
    %v591 = vsel %vm463, %v399, %v527
    %v592 = vsel %vm464, %v400, %v528
    %v593 = vsel %vm465, %v401, %v529
    %v594 = vsel %vm466, %v402, %v530
    %v595 = vsel %vm467, %v403, %v531
    %v596 = vsel %vm468, %v404, %v532
    %v597 = vsel %vm469, %v405, %v533
    %v598 = vsel %vm470, %v406, %v534
    %v599 = vsel %vm471, %v407, %v535
    %v600 = vsel %vm472, %v408, %v536
    %v601 = vsel %vm473, %v409, %v537
    %v602 = vsel %vm474, %v410, %v538
    %v603 = vsel %vm475, %v411, %v539
    %v604 = vsel %vm476, %v412, %v540
    %v605 = vsel %vm477, %v413, %v541
    %v606 = vsel %vm478, %v414, %v542
    %v607 = vsel %vm479, %v415, %v543
    %v608 = vsel %vm480, %v416, %v544
    %v609 = vsel %vm481, %v417, %v545
    %v610 = vsel %vm482, %v418, %v546
    %v611 = vsel %vm483, %v419, %v547
    %v612 = vsel %vm484, %v420, %v548
    %v613 = vsel %vm485, %v421, %v549
    %v614 = vsel %vm486, %v422, %v550
    %v615 = vsel %vm487, %v423, %v551
    %v616 = vsel %vm488, %v424, %v552
    %v617 = vsel %vm489, %v425, %v553
    %v618 = vsel %vm490, %v426, %v554
    %v619 = vsel %vm491, %v427, %v555
    %v620 = vsel %vm492, %v428, %v556
    %v621 = vsel %vm493, %v429, %v557
    %v622 = vsel %vm494, %v430, %v558
    %v623 = vsel %vm495, %v431, %v559
    %v624 = vsel %vm496, %v432, %v560
    %v625 = vsel %vm497, %v433, %v561
    %v626 = vsel %vm498, %v434, %v562
    %v627 = vsel %vm499, %v435, %v563
    %v628 = vsel %vm500, %v436, %v564
    %v629 = vsel %vm501, %v437, %v565
    %v630 = vsel %vm502, %v438, %v566
    %v631 = vsel %vm503, %v439, %v567
    %v632 = vsel %vm504, %v440, %v568
    %v633 = vsel %vm505, %v441, %v569
    %v634 = vsel %vm506, %v442, %v570
    %v635 = vsel %vm507, %v443, %v571
    %v636 = vsel %vm508, %v444, %v572
    %v637 = vsel %vm509, %v445, %v573
    %v638 = vsel %vm510, %v446, %v574
    %v639 = vsel %vm511, %v447, %v575
    %v640 = vsel %vm512, %v448, %v576
    %v641 = vsel %vm513, %v449, %v577
    %v642 = vsel %vm514, %v450, %v578
    %v643 = vsel %vm515, %v451, %v579
    %v644 = vsel %vm516, %v452, %v580
    %v645 = vsel %vm517, %v453, %v581
    %v646 = vsel %vm518, %v454, %v582
    %v647 = vld [vmem:[#allocation13] sm:$0xff]
    %v648 = vld [vmem:[#allocation13 + $0x8] sm:$0xff]
    %v649 = vld [vmem:[#allocation13 + $0x10] sm:$0xff]
    %v650 = vld [vmem:[#allocation13 + $0x18] sm:$0xff]
    %v651 = vld [vmem:[#allocation13 + $0x20] sm:$0xff]
    %v652 = vld [vmem:[#allocation13 + $0x28] sm:$0xff]
    %v653 = vld [vmem:[#allocation13 + $0x30] sm:$0xff]
    %v654 = vld [vmem:[#allocation13 + $0x38] sm:$0xff]
    %v655 = vld [vmem:[#allocation13 + $0x40] sm:$0xff]
    %v656 = vld [vmem:[#allocation13 + $0x48] sm:$0xff]
    %v657 = vld [vmem:[#allocation13 + $0x50] sm:$0xff]
    %v658 = vld [vmem:[#allocation13 + $0x58] sm:$0xff]
    %v659 = vld [vmem:[#allocation13 + $0x60] sm:$0xff]
    %v660 = vld [vmem:[#allocation13 + $0x68] sm:$0xff]
    %v661 = vld [vmem:[#allocation13 + $0x70] sm:$0xff]
    %v662 = vld [vmem:[#allocation13 + $0x78] sm:$0xff]
    %v663 = vunpack.c.0.s8 %v647
    %v664 = vunpack.c.0.s8 %v648
    %v665 = vunpack.c.1.s8 %v647
    %v666 = vunpack.c.1.s8 %v648
    %v667 = vunpack.c.2.s8 %v647
    %v668 = vunpack.c.2.s8 %v648
    %v669 = vunpack.c.3.s8 %v647
    %v670 = vunpack.c.3.s8 %v648
    %v671 = vunpack.c.0.s8 %v649
    %v672 = vunpack.c.0.s8 %v650
    %v673 = vunpack.c.1.s8 %v649
    %v674 = vunpack.c.1.s8 %v650
    %v675 = vunpack.c.2.s8 %v649
    %v676 = vunpack.c.2.s8 %v650
    %v677 = vunpack.c.3.s8 %v649
    %v678 = vunpack.c.3.s8 %v650
    %v679 = vunpack.c.0.s8 %v651
    %v680 = vunpack.c.0.s8 %v652
    %v681 = vunpack.c.1.s8 %v651
    %v682 = vunpack.c.1.s8 %v652
    %v683 = vunpack.c.2.s8 %v651
    %v684 = vunpack.c.2.s8 %v652
    %v685 = vunpack.c.3.s8 %v651
    %v686 = vunpack.c.3.s8 %v652
    %v687 = vunpack.c.0.s8 %v653
    %v688 = vunpack.c.0.s8 %v654
    %v689 = vunpack.c.1.s8 %v653
    %v690 = vunpack.c.1.s8 %v654
    %v691 = vunpack.c.2.s8 %v653
    %v692 = vunpack.c.2.s8 %v654
    %v693 = vunpack.c.3.s8 %v653
    %v694 = vunpack.c.3.s8 %v654
    %v695 = vunpack.c.0.s8 %v655
    %v696 = vunpack.c.0.s8 %v656
    %v697 = vunpack.c.1.s8 %v655
    %v698 = vunpack.c.1.s8 %v656
    %v699 = vunpack.c.2.s8 %v655
    %v700 = vunpack.c.2.s8 %v656
    %v701 = vunpack.c.3.s8 %v655
    %v702 = vunpack.c.3.s8 %v656
    %v703 = vunpack.c.0.s8 %v657
    %v704 = vunpack.c.0.s8 %v658
    %v705 = vunpack.c.1.s8 %v657
    %v706 = vunpack.c.1.s8 %v658
    %v707 = vunpack.c.2.s8 %v657
    %v708 = vunpack.c.2.s8 %v658
    %v709 = vunpack.c.3.s8 %v657
    %v710 = vunpack.c.3.s8 %v658
    %v711 = vunpack.c.0.s8 %v659
    %v712 = vunpack.c.0.s8 %v660
    %v713 = vunpack.c.1.s8 %v659
    %v714 = vunpack.c.1.s8 %v660
    %v715 = vunpack.c.2.s8 %v659
    %v716 = vunpack.c.2.s8 %v660
    %v717 = vunpack.c.3.s8 %v659
    %v718 = vunpack.c.3.s8 %v660
    %v719 = vunpack.c.0.s8 %v661
    %v720 = vunpack.c.0.s8 %v662
    %v721 = vunpack.c.1.s8 %v661
    %v722 = vunpack.c.1.s8 %v662
    %v723 = vunpack.c.2.s8 %v661
    %v724 = vunpack.c.2.s8 %v662
    %v725 = vunpack.c.3.s8 %v661
    %v726 = vunpack.c.3.s8 %v662
    %v727 = vcvt.s32.f32 %v663
    %v728 = vcvt.s32.f32 %v664
    %v729 = vcvt.s32.f32 %v665
    %v730 = vcvt.s32.f32 %v666
    %v731 = vcvt.s32.f32 %v667
    %v732 = vcvt.s32.f32 %v668
    %v733 = vcvt.s32.f32 %v669
    %v734 = vcvt.s32.f32 %v670
    %v735 = vcvt.s32.f32 %v671
    %v736 = vcvt.s32.f32 %v672
    %v737 = vcvt.s32.f32 %v673
    %v738 = vcvt.s32.f32 %v674
    %v739 = vcvt.s32.f32 %v675
    %v740 = vcvt.s32.f32 %v676
    %v741 = vcvt.s32.f32 %v677
    %v742 = vcvt.s32.f32 %v678
    %v743 = vcvt.s32.f32 %v679
    %v744 = vcvt.s32.f32 %v680
    %v745 = vcvt.s32.f32 %v681
    %v746 = vcvt.s32.f32 %v682
    %v747 = vcvt.s32.f32 %v683
    %v748 = vcvt.s32.f32 %v684
    %v749 = vcvt.s32.f32 %v685
    %v750 = vcvt.s32.f32 %v686
    %v751 = vcvt.s32.f32 %v687
    %v752 = vcvt.s32.f32 %v688
    %v753 = vcvt.s32.f32 %v689
    %v754 = vcvt.s32.f32 %v690
    %v755 = vcvt.s32.f32 %v691
    %v756 = vcvt.s32.f32 %v692
    %v757 = vcvt.s32.f32 %v693
    %v758 = vcvt.s32.f32 %v694
    %v759 = vcvt.s32.f32 %v695
    %v760 = vcvt.s32.f32 %v696
    %v761 = vcvt.s32.f32 %v697
    %v762 = vcvt.s32.f32 %v698
    %v763 = vcvt.s32.f32 %v699
    %v764 = vcvt.s32.f32 %v700
    %v765 = vcvt.s32.f32 %v701
    %v766 = vcvt.s32.f32 %v702
    %v767 = vcvt.s32.f32 %v703
    %v768 = vcvt.s32.f32 %v704
    %v769 = vcvt.s32.f32 %v705
    %v770 = vcvt.s32.f32 %v706
    %v771 = vcvt.s32.f32 %v707
    %v772 = vcvt.s32.f32 %v708
    %v773 = vcvt.s32.f32 %v709
    %v774 = vcvt.s32.f32 %v710
    %v775 = vcvt.s32.f32 %v711
    %v776 = vcvt.s32.f32 %v712
    %v777 = vcvt.s32.f32 %v713
    %v778 = vcvt.s32.f32 %v714
    %v779 = vcvt.s32.f32 %v715
    %v780 = vcvt.s32.f32 %v716
    %v781 = vcvt.s32.f32 %v717
    %v782 = vcvt.s32.f32 %v718
    %v783 = vcvt.s32.f32 %v719
    %v784 = vcvt.s32.f32 %v720
    %v785 = vcvt.s32.f32 %v721
    %v786 = vcvt.s32.f32 %v722
    %v787 = vcvt.s32.f32 %v723
    %v788 = vcvt.s32.f32 %v724
    %v789 = vcvt.s32.f32 %v725
    %v790 = vcvt.s32.f32 %v726
    %v791 = vld [vmem:[#allocation2] sm:$0xff]
    %v792 = vld [vmem:[#allocation2 + $0x8] sm:$0xff]
    %v793 = vld [vmem:[#allocation2 + $0x10] sm:$0xff]
    %v794 = vld [vmem:[#allocation2 + $0x18] sm:$0xff]
    %v795 = vld [vmem:[#allocation2 + $0x20] sm:$0xff]
    %v796 = vld [vmem:[#allocation2 + $0x28] sm:$0xff]
    %v797 = vld [vmem:[#allocation2 + $0x30] sm:$0xff]
    %v798 = vld [vmem:[#allocation2 + $0x38] sm:$0xff]
    %v799 = vld [vmem:[#allocation2 + $0x40] sm:$0xff]
    %v800 = vld [vmem:[#allocation2 + $0x48] sm:$0xff]
    %v801 = vld [vmem:[#allocation2 + $0x50] sm:$0xff]
    %v802 = vld [vmem:[#allocation2 + $0x58] sm:$0xff]
    %v803 = vld [vmem:[#allocation2 + $0x60] sm:$0xff]
    %v804 = vld [vmem:[#allocation2 + $0x68] sm:$0xff]
    %v805 = vld [vmem:[#allocation2 + $0x70] sm:$0xff]
    %v806 = vld [vmem:[#allocation2 + $0x78] sm:$0xff]
    %v807 = vld [vmem:[#allocation2 + $0x80] sm:$0xff]
    %v808 = vld [vmem:[#allocation2 + $0x88] sm:$0xff]
    %v809 = vld [vmem:[#allocation2 + $0x90] sm:$0xff]
    %v810 = vld [vmem:[#allocation2 + $0x98] sm:$0xff]
    %v811 = vld [vmem:[#allocation2 + $0xa0] sm:$0xff]
    %v812 = vld [vmem:[#allocation2 + $0xa8] sm:$0xff]
    %v813 = vld [vmem:[#allocation2 + $0xb0] sm:$0xff]
    %v814 = vld [vmem:[#allocation2 + $0xb8] sm:$0xff]
    %v815 = vld [vmem:[#allocation2 + $0xc0] sm:$0xff]
    %v816 = vld [vmem:[#allocation2 + $0xc8] sm:$0xff]
    %v817 = vld [vmem:[#allocation2 + $0xd0] sm:$0xff]
    %v818 = vld [vmem:[#allocation2 + $0xd8] sm:$0xff]
    %v819 = vld [vmem:[#allocation2 + $0xe0] sm:$0xff]
    %v820 = vld [vmem:[#allocation2 + $0xe8] sm:$0xff]
    %v821 = vld [vmem:[#allocation2 + $0xf0] sm:$0xff]
    %v822 = vld [vmem:[#allocation2 + $0xf8] sm:$0xff]
    %v823 = vmax.f32 %v583, %v584
    %824 = vmax.xlane.f32.xlu0 %v823
    %v825 = vpop.xlane.xlu0 %824
    %v826 = vmax.f32 %v585, %v586
    %827 = vmax.xlane.f32.xlu0 %v826
    %v828 = vpop.xlane.xlu0 %827
    %v829 = vmax.f32 %v587, %v588
    %830 = vmax.xlane.f32.xlu0 %v829
    %v831 = vpop.xlane.xlu0 %830
    %v832 = vmax.f32 %v589, %v590
    %833 = vmax.xlane.f32.xlu0 %v832
    %v834 = vpop.xlane.xlu0 %833
    %v835 = vmax.f32 %v591, %v592
    %836 = vmax.xlane.f32.xlu0 %v835
    %v837 = vpop.xlane.xlu0 %836
    %v838 = vmax.f32 %v593, %v594
    %839 = vmax.xlane.f32.xlu0 %v838
    %v840 = vpop.xlane.xlu0 %839
    %v841 = vmax.f32 %v595, %v596
    %842 = vmax.xlane.f32.xlu0 %v841
    %v843 = vpop.xlane.xlu0 %842
    %v844 = vmax.f32 %v597, %v598
    %845 = vmax.xlane.f32.xlu0 %v844
    %v846 = vpop.xlane.xlu0 %845
    %v847 = vmax.f32 %v599, %v600
    %848 = vmax.xlane.f32.xlu0 %v847
    %v849 = vpop.xlane.xlu0 %848
    %v850 = vmax.f32 %v601, %v602
    %851 = vmax.xlane.f32.xlu0 %v850
    %v852 = vpop.xlane.xlu0 %851
    %v853 = vmax.f32 %v603, %v604
    %854 = vmax.xlane.f32.xlu0 %v853
    %v855 = vpop.xlane.xlu0 %854
    %v856 = vmax.f32 %v605, %v606
    %857 = vmax.xlane.f32.xlu0 %v856
    %v858 = vpop.xlane.xlu0 %857
    %v859 = vmax.f32 %v607, %v608
    %860 = vmax.xlane.f32.xlu0 %v859
    %v861 = vpop.xlane.xlu0 %860
    %v862 = vmax.f32 %v609, %v610
    %863 = vmax.xlane.f32.xlu0 %v862
    %v864 = vpop.xlane.xlu0 %863
    %v865 = vmax.f32 %v611, %v612
    %866 = vmax.xlane.f32.xlu0 %v865
    %v867 = vpop.xlane.xlu0 %866
    %v868 = vmax.f32 %v613, %v614
    %869 = vmax.xlane.f32.xlu0 %v868
    %v870 = vpop.xlane.xlu0 %869
    %v871 = vmax.f32 %v615, %v616
    %872 = vmax.xlane.f32.xlu0 %v871
    %v873 = vpop.xlane.xlu0 %872
    %v874 = vmax.f32 %v617, %v618
    %875 = vmax.xlane.f32.xlu0 %v874
    %v876 = vpop.xlane.xlu0 %875
    %v877 = vmax.f32 %v619, %v620
    %878 = vmax.xlane.f32.xlu0 %v877
    %v879 = vpop.xlane.xlu0 %878
    %v880 = vmax.f32 %v621, %v622
    %881 = vmax.xlane.f32.xlu0 %v880
    %v882 = vpop.xlane.xlu0 %881
    %v883 = vmax.f32 %v623, %v624
    %884 = vmax.xlane.f32.xlu0 %v883
    %v885 = vpop.xlane.xlu0 %884
    %v886 = vmax.f32 %v625, %v626
    %887 = vmax.xlane.f32.xlu0 %v886
    %v888 = vpop.xlane.xlu0 %887
    %v889 = vmax.f32 %v627, %v628
    %890 = vmax.xlane.f32.xlu0 %v889
    %v891 = vpop.xlane.xlu0 %890
    %v892 = vmax.f32 %v629, %v630
    %893 = vmax.xlane.f32.xlu0 %v892
    %v894 = vpop.xlane.xlu0 %893
    %v895 = vmax.f32 %v631, %v632
    %896 = vmax.xlane.f32.xlu0 %v895
    %v897 = vpop.xlane.xlu0 %896
    %v898 = vmax.f32 %v633, %v634
    %899 = vmax.xlane.f32.xlu0 %v898
    %v900 = vpop.xlane.xlu0 %899
    %v901 = vmax.f32 %v635, %v636
    %902 = vmax.xlane.f32.xlu0 %v901
    %v903 = vpop.xlane.xlu0 %902
    %v904 = vmax.f32 %v637, %v638
    %905 = vmax.xlane.f32.xlu0 %v904
    %v906 = vpop.xlane.xlu0 %905
    %v907 = vmax.f32 %v639, %v640
    %908 = vmax.xlane.f32.xlu0 %v907
    %v909 = vpop.xlane.xlu0 %908
    %v910 = vmax.f32 %v641, %v642
    %911 = vmax.xlane.f32.xlu0 %v910
    %v912 = vpop.xlane.xlu0 %911
    %v913 = vmax.f32 %v643, %v644
    %914 = vmax.xlane.f32.xlu0 %v913
    %v915 = vpop.xlane.xlu0 %914
    %v916 = vmax.f32 %v645, %v646
    %917 = vmax.xlane.f32.xlu0 %v916
    %v918 = vpop.xlane.xlu0 %917
    %v919 = vmax.f32 %v791, %v825
    %v920 = vmax.f32 %v792, %v828
    %v921 = vmax.f32 %v793, %v831
    %v922 = vmax.f32 %v794, %v834
    %v923 = vmax.f32 %v795, %v837
    %v924 = vmax.f32 %v796, %v840
    %v925 = vmax.f32 %v797, %v843
    %v926 = vmax.f32 %v798, %v846
    %v927 = vmax.f32 %v799, %v849
    %v928 = vmax.f32 %v800, %v852
    %v929 = vmax.f32 %v801, %v855
    %v930 = vmax.f32 %v802, %v858
    %v931 = vmax.f32 %v803, %v861
    %v932 = vmax.f32 %v804, %v864
    %v933 = vmax.f32 %v805, %v867
    %v934 = vmax.f32 %v806, %v870
    %v935 = vmax.f32 %v807, %v873
    %v936 = vmax.f32 %v808, %v876
    %v937 = vmax.f32 %v809, %v879
    %v938 = vmax.f32 %v810, %v882
    %v939 = vmax.f32 %v811, %v885
    %v940 = vmax.f32 %v812, %v888
    %v941 = vmax.f32 %v813, %v891
    %v942 = vmax.f32 %v814, %v894
    %v943 = vmax.f32 %v815, %v897
    %v944 = vmax.f32 %v816, %v900
    %v945 = vmax.f32 %v817, %v903
    %v946 = vmax.f32 %v818, %v906
    %v947 = vmax.f32 %v819, %v909
    %v948 = vmax.f32 %v820, %v912
    %v949 = vmax.f32 %v821, %v915
    %v950 = vmax.f32 %v822, %v918
    %v951 = vsub.f32 %v791, %v919
    %v952 = vsub.f32 %v792, %v920
    %v953 = vsub.f32 %v793, %v921
    %v954 = vsub.f32 %v794, %v922
    %v955 = vsub.f32 %v795, %v923
    %v956 = vsub.f32 %v796, %v924
    %v957 = vsub.f32 %v797, %v925
    %v958 = vsub.f32 %v798, %v926
    %v959 = vsub.f32 %v799, %v927
    %v960 = vsub.f32 %v800, %v928
    %v961 = vsub.f32 %v801, %v929
    %v962 = vsub.f32 %v802, %v930
    %v963 = vsub.f32 %v803, %v931
    %v964 = vsub.f32 %v804, %v932
    %v965 = vsub.f32 %v805, %v933
    %v966 = vsub.f32 %v806, %v934
    %v967 = vsub.f32 %v807, %v935
    %v968 = vsub.f32 %v808, %v936
    %v969 = vsub.f32 %v809, %v937
    %v970 = vsub.f32 %v810, %v938
    %v971 = vsub.f32 %v811, %v939
    %v972 = vsub.f32 %v812, %v940
    %v973 = vsub.f32 %v813, %v941
    %v974 = vsub.f32 %v814, %v942
    %v975 = vsub.f32 %v815, %v943
    %v976 = vsub.f32 %v816, %v944
    %v977 = vsub.f32 %v817, %v945
    %v978 = vsub.f32 %v818, %v946
    %v979 = vsub.f32 %v819, %v947
    %v980 = vsub.f32 %v820, %v948
    %v981 = vsub.f32 %v821, %v949
    %v982 = vsub.f32 %v822, %v950
    %v983 = vmul.f32 %v951, 1.442695
    %v984 = vpow.pop %v983
    %v985 = vmul.f32 %v952, 1.442695
    %v986 = vpow.pop %v985
    %v987 = vmul.f32 %v953, 1.442695
    %v988 = vpow.pop %v987
    %v989 = vmul.f32 %v954, 1.442695
    %v990 = vpow.pop %v989
    %v991 = vmul.f32 %v955, 1.442695
    %v992 = vpow.pop %v991
    %v993 = vmul.f32 %v956, 1.442695
    %v994 = vpow.pop %v993
    %v995 = vmul.f32 %v957, 1.442695
    %v996 = vpow.pop %v995
    %v997 = vmul.f32 %v958, 1.442695
    %v998 = vpow.pop %v997
    %v999 = vmul.f32 %v959, 1.442695
    %v1000 = vpow.pop %v999
    %v1001 = vmul.f32 %v960, 1.442695
    %v1002 = vpow.pop %v1001
    %v1003 = vmul.f32 %v961, 1.442695
    %v1004 = vpow.pop %v1003
    %v1005 = vmul.f32 %v962, 1.442695
    %v1006 = vpow.pop %v1005
    %v1007 = vmul.f32 %v963, 1.442695
    %v1008 = vpow.pop %v1007
    %v1009 = vmul.f32 %v964, 1.442695
    %v1010 = vpow.pop %v1009
    %v1011 = vmul.f32 %v965, 1.442695
    %v1012 = vpow.pop %v1011
    %v1013 = vmul.f32 %v966, 1.442695
    %v1014 = vpow.pop %v1013
    %v1015 = vmul.f32 %v967, 1.442695
    %v1016 = vpow.pop %v1015
    %v1017 = vmul.f32 %v968, 1.442695
    %v1018 = vpow.pop %v1017
    %v1019 = vmul.f32 %v969, 1.442695
    %v1020 = vpow.pop %v1019
    %v1021 = vmul.f32 %v970, 1.442695
    %v1022 = vpow.pop %v1021
    %v1023 = vmul.f32 %v971, 1.442695
    %v1024 = vpow.pop %v1023
    %v1025 = vmul.f32 %v972, 1.442695
    %v1026 = vpow.pop %v1025
    %v1027 = vmul.f32 %v973, 1.442695
    %v1028 = vpow.pop %v1027
    %v1029 = vmul.f32 %v974, 1.442695
    %v1030 = vpow.pop %v1029
    %v1031 = vmul.f32 %v975, 1.442695
    %v1032 = vpow.pop %v1031
    %v1033 = vmul.f32 %v976, 1.442695
    %v1034 = vpow.pop %v1033
    %v1035 = vmul.f32 %v977, 1.442695
    %v1036 = vpow.pop %v1035
    %v1037 = vmul.f32 %v978, 1.442695
    %v1038 = vpow.pop %v1037
    %v1039 = vmul.f32 %v979, 1.442695
    %v1040 = vpow.pop %v1039
    %v1041 = vmul.f32 %v980, 1.442695
    %v1042 = vpow.pop %v1041
    %v1043 = vmul.f32 %v981, 1.442695
    %v1044 = vpow.pop %v1043
    %v1045 = vmul.f32 %v982, 1.442695
    %v1046 = vpow.pop %v1045
    %1048 = vset.pattern.permute.xlu0 0
    %1049 = vperm.xlu0 %1048, %v919
    %v1050 = vpop.permute.xlu0 %1049
    %1053 = vset.pattern.permute.xlu0 0
    %1054 = vperm.xlu0 %1053, %v920
    %v1055 = vpop.permute.xlu0 %1054
    %1058 = vset.pattern.permute.xlu0 0
    %1059 = vperm.xlu0 %1058, %v921
    %v1060 = vpop.permute.xlu0 %1059
    %1063 = vset.pattern.permute.xlu0 0
    %1064 = vperm.xlu0 %1063, %v922
    %v1065 = vpop.permute.xlu0 %1064
    %1068 = vset.pattern.permute.xlu0 0
    %1069 = vperm.xlu0 %1068, %v923
    %v1070 = vpop.permute.xlu0 %1069
    %1073 = vset.pattern.permute.xlu0 0
    %1074 = vperm.xlu0 %1073, %v924
    %v1075 = vpop.permute.xlu0 %1074
    %1078 = vset.pattern.permute.xlu0 0
    %1079 = vperm.xlu0 %1078, %v925
    %v1080 = vpop.permute.xlu0 %1079
    %1083 = vset.pattern.permute.xlu0 0
    %1084 = vperm.xlu0 %1083, %v926
    %v1085 = vpop.permute.xlu0 %1084
    %1088 = vset.pattern.permute.xlu0 0
    %1089 = vperm.xlu0 %1088, %v927
    %v1090 = vpop.permute.xlu0 %1089
    %1093 = vset.pattern.permute.xlu0 0
    %1094 = vperm.xlu0 %1093, %v928
    %v1095 = vpop.permute.xlu0 %1094
    %1098 = vset.pattern.permute.xlu0 0
    %1099 = vperm.xlu0 %1098, %v929
    %v1100 = vpop.permute.xlu0 %1099
    %1103 = vset.pattern.permute.xlu0 0
    %1104 = vperm.xlu0 %1103, %v930
    %v1105 = vpop.permute.xlu0 %1104
    %1108 = vset.pattern.permute.xlu0 0
    %1109 = vperm.xlu0 %1108, %v931
    %v1110 = vpop.permute.xlu0 %1109
    %1113 = vset.pattern.permute.xlu0 0
    %1114 = vperm.xlu0 %1113, %v932
    %v1115 = vpop.permute.xlu0 %1114
    %1118 = vset.pattern.permute.xlu0 0
    %1119 = vperm.xlu0 %1118, %v933
    %v1120 = vpop.permute.xlu0 %1119
    %1123 = vset.pattern.permute.xlu0 0
    %1124 = vperm.xlu0 %1123, %v934
    %v1125 = vpop.permute.xlu0 %1124
    %1128 = vset.pattern.permute.xlu0 0
    %1129 = vperm.xlu0 %1128, %v935
    %v1130 = vpop.permute.xlu0 %1129
    %1133 = vset.pattern.permute.xlu0 0
    %1134 = vperm.xlu0 %1133, %v936
    %v1135 = vpop.permute.xlu0 %1134
    %1138 = vset.pattern.permute.xlu0 0
    %1139 = vperm.xlu0 %1138, %v937
    %v1140 = vpop.permute.xlu0 %1139
    %1143 = vset.pattern.permute.xlu0 0
    %1144 = vperm.xlu0 %1143, %v938
    %v1145 = vpop.permute.xlu0 %1144
    %1148 = vset.pattern.permute.xlu0 0
    %1149 = vperm.xlu0 %1148, %v939
    %v1150 = vpop.permute.xlu0 %1149
    %1153 = vset.pattern.permute.xlu0 0
    %1154 = vperm.xlu0 %1153, %v940
    %v1155 = vpop.permute.xlu0 %1154
    %1158 = vset.pattern.permute.xlu0 0
    %1159 = vperm.xlu0 %1158, %v941
    %v1160 = vpop.permute.xlu0 %1159
    %1163 = vset.pattern.permute.xlu0 0
    %1164 = vperm.xlu0 %1163, %v942
    %v1165 = vpop.permute.xlu0 %1164
    %1168 = vset.pattern.permute.xlu0 0
    %1169 = vperm.xlu0 %1168, %v943
    %v1170 = vpop.permute.xlu0 %1169
    %1173 = vset.pattern.permute.xlu0 0
    %1174 = vperm.xlu0 %1173, %v944
    %v1175 = vpop.permute.xlu0 %1174
    %1178 = vset.pattern.permute.xlu0 0
    %1179 = vperm.xlu0 %1178, %v945
    %v1180 = vpop.permute.xlu0 %1179
    %1183 = vset.pattern.permute.xlu0 0
    %1184 = vperm.xlu0 %1183, %v946
    %v1185 = vpop.permute.xlu0 %1184
    %1188 = vset.pattern.permute.xlu0 0
    %1189 = vperm.xlu0 %1188, %v947
    %v1190 = vpop.permute.xlu0 %1189
    %1193 = vset.pattern.permute.xlu0 0
    %1194 = vperm.xlu0 %1193, %v948
    %v1195 = vpop.permute.xlu0 %1194
    %1198 = vset.pattern.permute.xlu0 0
    %1199 = vperm.xlu0 %1198, %v949
    %v1200 = vpop.permute.xlu0 %1199
    %1203 = vset.pattern.permute.xlu0 0
    %1204 = vperm.xlu0 %1203, %v950
    %v1205 = vpop.permute.xlu0 %1204
    %v1207 = vsub.f32 %v583, %v1050
    %v1208 = vsub.f32 %v584, %v1050
    %v1209 = vsub.f32 %v585, %v1055
    %v1210 = vsub.f32 %v586, %v1055
    %v1211 = vsub.f32 %v587, %v1060
    %v1212 = vsub.f32 %v588, %v1060
    %v1213 = vsub.f32 %v589, %v1065
    %v1214 = vsub.f32 %v590, %v1065
    %v1215 = vsub.f32 %v591, %v1070
    %v1216 = vsub.f32 %v592, %v1070
    %v1217 = vsub.f32 %v593, %v1075
    %v1218 = vsub.f32 %v594, %v1075
    %v1219 = vsub.f32 %v595, %v1080
    %v1220 = vsub.f32 %v596, %v1080
    %v1221 = vsub.f32 %v597, %v1085
    %v1222 = vsub.f32 %v598, %v1085
    %v1223 = vsub.f32 %v599, %v1090
    %v1224 = vsub.f32 %v600, %v1090
    %v1225 = vsub.f32 %v601, %v1095
    %v1226 = vsub.f32 %v602, %v1095
    %v1227 = vsub.f32 %v603, %v1100
    %v1228 = vsub.f32 %v604, %v1100
    %v1229 = vsub.f32 %v605, %v1105
    %v1230 = vsub.f32 %v606, %v1105
    %v1231 = vsub.f32 %v607, %v1110
    %v1232 = vsub.f32 %v608, %v1110
    %v1233 = vsub.f32 %v609, %v1115
    %v1234 = vsub.f32 %v610, %v1115
    %v1235 = vsub.f32 %v611, %v1120
    %v1236 = vsub.f32 %v612, %v1120
    %v1237 = vsub.f32 %v613, %v1125
    %v1238 = vsub.f32 %v614, %v1125
    %v1239 = vsub.f32 %v615, %v1130
    %v1240 = vsub.f32 %v616, %v1130
    %v1241 = vsub.f32 %v617, %v1135
    %v1242 = vsub.f32 %v618, %v1135
    %v1243 = vsub.f32 %v619, %v1140
    %v1244 = vsub.f32 %v620, %v1140
    %v1245 = vsub.f32 %v621, %v1145
    %v1246 = vsub.f32 %v622, %v1145
    %v1247 = vsub.f32 %v623, %v1150
    %v1248 = vsub.f32 %v624, %v1150
    %v1249 = vsub.f32 %v625, %v1155
    %v1250 = vsub.f32 %v626, %v1155
    %v1251 = vsub.f32 %v627, %v1160
    %v1252 = vsub.f32 %v628, %v1160
    %v1253 = vsub.f32 %v629, %v1165
    %v1254 = vsub.f32 %v630, %v1165
    %v1255 = vsub.f32 %v631, %v1170
    %v1256 = vsub.f32 %v632, %v1170
    %v1257 = vsub.f32 %v633, %v1175
    %v1258 = vsub.f32 %v634, %v1175
    %v1259 = vsub.f32 %v635, %v1180
    %v1260 = vsub.f32 %v636, %v1180
    %v1261 = vsub.f32 %v637, %v1185
    %v1262 = vsub.f32 %v638, %v1185
    %v1263 = vsub.f32 %v639, %v1190
    %v1264 = vsub.f32 %v640, %v1190
    %v1265 = vsub.f32 %v641, %v1195
    %v1266 = vsub.f32 %v642, %v1195
    %v1267 = vsub.f32 %v643, %v1200
    %v1268 = vsub.f32 %v644, %v1200
    %v1269 = vsub.f32 %v645, %v1205
    %v1270 = vsub.f32 %v646, %v1205
    %v1271 = vmul.f32 %v1207, 1.442695
    %v1272 = vpow.pop %v1271
    %v1273 = vmul.f32 %v1208, 1.442695
    %v1274 = vpow.pop %v1273
    %v1275 = vmul.f32 %v1209, 1.442695
    %v1276 = vpow.pop %v1275
    %v1277 = vmul.f32 %v1210, 1.442695
    %v1278 = vpow.pop %v1277
    %v1279 = vmul.f32 %v1211, 1.442695
    %v1280 = vpow.pop %v1279
    %v1281 = vmul.f32 %v1212, 1.442695
    %v1282 = vpow.pop %v1281
    %v1283 = vmul.f32 %v1213, 1.442695
    %v1284 = vpow.pop %v1283
    %v1285 = vmul.f32 %v1214, 1.442695
    %v1286 = vpow.pop %v1285
    %v1287 = vmul.f32 %v1215, 1.442695
    %v1288 = vpow.pop %v1287
    %v1289 = vmul.f32 %v1216, 1.442695
    %v1290 = vpow.pop %v1289
    %v1291 = vmul.f32 %v1217, 1.442695
    %v1292 = vpow.pop %v1291
    %v1293 = vmul.f32 %v1218, 1.442695
    %v1294 = vpow.pop %v1293
    %v1295 = vmul.f32 %v1219, 1.442695
    %v1296 = vpow.pop %v1295
    %v1297 = vmul.f32 %v1220, 1.442695
    %v1298 = vpow.pop %v1297
    %v1299 = vmul.f32 %v1221, 1.442695
    %v1300 = vpow.pop %v1299
    %v1301 = vmul.f32 %v1222, 1.442695
    %v1302 = vpow.pop %v1301
    %v1303 = vmul.f32 %v1223, 1.442695
    %v1304 = vpow.pop %v1303
    %v1305 = vmul.f32 %v1224, 1.442695
    %v1306 = vpow.pop %v1305
    %v1307 = vmul.f32 %v1225, 1.442695
    %v1308 = vpow.pop %v1307
    %v1309 = vmul.f32 %v1226, 1.442695
    %v1310 = vpow.pop %v1309
    %v1311 = vmul.f32 %v1227, 1.442695
    %v1312 = vpow.pop %v1311
    %v1313 = vmul.f32 %v1228, 1.442695
    %v1314 = vpow.pop %v1313
    %v1315 = vmul.f32 %v1229, 1.442695
    %v1316 = vpow.pop %v1315
    %v1317 = vmul.f32 %v1230, 1.442695
    %v1318 = vpow.pop %v1317
    %v1319 = vmul.f32 %v1231, 1.442695
    %v1320 = vpow.pop %v1319
    %v1321 = vmul.f32 %v1232, 1.442695
    %v1322 = vpow.pop %v1321
    %v1323 = vmul.f32 %v1233, 1.442695
    %v1324 = vpow.pop %v1323
    %v1325 = vmul.f32 %v1234, 1.442695
    %v1326 = vpow.pop %v1325
    %v1327 = vmul.f32 %v1235, 1.442695
    %v1328 = vpow.pop %v1327
    %v1329 = vmul.f32 %v1236, 1.442695
    %v1330 = vpow.pop %v1329
    %v1331 = vmul.f32 %v1237, 1.442695
    %v1332 = vpow.pop %v1331
    %v1333 = vmul.f32 %v1238, 1.442695
    %v1334 = vpow.pop %v1333
    %v1335 = vmul.f32 %v1239, 1.442695
    %v1336 = vpow.pop %v1335
    %v1337 = vmul.f32 %v1240, 1.442695
    %v1338 = vpow.pop %v1337
    %v1339 = vmul.f32 %v1241, 1.442695
    %v1340 = vpow.pop %v1339
    %v1341 = vmul.f32 %v1242, 1.442695
    %v1342 = vpow.pop %v1341
    %v1343 = vmul.f32 %v1243, 1.442695
    %v1344 = vpow.pop %v1343
    %v1345 = vmul.f32 %v1244, 1.442695
    %v1346 = vpow.pop %v1345
    %v1347 = vmul.f32 %v1245, 1.442695
    %v1348 = vpow.pop %v1347
    %v1349 = vmul.f32 %v1246, 1.442695
    %v1350 = vpow.pop %v1349
    %v1351 = vmul.f32 %v1247, 1.442695
    %v1352 = vpow.pop %v1351
    %v1353 = vmul.f32 %v1248, 1.442695
    %v1354 = vpow.pop %v1353
    %v1355 = vmul.f32 %v1249, 1.442695
    %v1356 = vpow.pop %v1355
    %v1357 = vmul.f32 %v1250, 1.442695
    %v1358 = vpow.pop %v1357
    %v1359 = vmul.f32 %v1251, 1.442695
    %v1360 = vpow.pop %v1359
    %v1361 = vmul.f32 %v1252, 1.442695
    %v1362 = vpow.pop %v1361
    %v1363 = vmul.f32 %v1253, 1.442695
    %v1364 = vpow.pop %v1363
    %v1365 = vmul.f32 %v1254, 1.442695
    %v1366 = vpow.pop %v1365
    %v1367 = vmul.f32 %v1255, 1.442695
    %v1368 = vpow.pop %v1367
    %v1369 = vmul.f32 %v1256, 1.442695
    %v1370 = vpow.pop %v1369
    %v1371 = vmul.f32 %v1257, 1.442695
    %v1372 = vpow.pop %v1371
    %v1373 = vmul.f32 %v1258, 1.442695
    %v1374 = vpow.pop %v1373
    %v1375 = vmul.f32 %v1259, 1.442695
    %v1376 = vpow.pop %v1375
    %v1377 = vmul.f32 %v1260, 1.442695
    %v1378 = vpow.pop %v1377
    %v1379 = vmul.f32 %v1261, 1.442695
    %v1380 = vpow.pop %v1379
    %v1381 = vmul.f32 %v1262, 1.442695
    %v1382 = vpow.pop %v1381
    %v1383 = vmul.f32 %v1263, 1.442695
    %v1384 = vpow.pop %v1383
    %v1385 = vmul.f32 %v1264, 1.442695
    %v1386 = vpow.pop %v1385
    %v1387 = vmul.f32 %v1265, 1.442695
    %v1388 = vpow.pop %v1387
    %v1389 = vmul.f32 %v1266, 1.442695
    %v1390 = vpow.pop %v1389
    %v1391 = vmul.f32 %v1267, 1.442695
    %v1392 = vpow.pop %v1391
    %v1393 = vmul.f32 %v1268, 1.442695
    %v1394 = vpow.pop %v1393
    %v1395 = vmul.f32 %v1269, 1.442695
    %v1396 = vpow.pop %v1395
    %v1397 = vmul.f32 %v1270, 1.442695
    %v1398 = vpow.pop %v1397
    %v1399 = vmul.f32 %v727, %v1272
    %v1400 = vmul.f32 %v728, %v1274
    %v1401 = vmul.f32 %v729, %v1276
    %v1402 = vmul.f32 %v730, %v1278
    %v1403 = vmul.f32 %v731, %v1280
    %v1404 = vmul.f32 %v732, %v1282
    %v1405 = vmul.f32 %v733, %v1284
    %v1406 = vmul.f32 %v734, %v1286
    %v1407 = vmul.f32 %v735, %v1288
    %v1408 = vmul.f32 %v736, %v1290
    %v1409 = vmul.f32 %v737, %v1292
    %v1410 = vmul.f32 %v738, %v1294
    %v1411 = vmul.f32 %v739, %v1296
    %v1412 = vmul.f32 %v740, %v1298
    %v1413 = vmul.f32 %v741, %v1300
    %v1414 = vmul.f32 %v742, %v1302
    %v1415 = vmul.f32 %v743, %v1304
    %v1416 = vmul.f32 %v744, %v1306
    %v1417 = vmul.f32 %v745, %v1308
    %v1418 = vmul.f32 %v746, %v1310
    %v1419 = vmul.f32 %v747, %v1312
    %v1420 = vmul.f32 %v748, %v1314
    %v1421 = vmul.f32 %v749, %v1316
    %v1422 = vmul.f32 %v750, %v1318
    %v1423 = vmul.f32 %v751, %v1320
    %v1424 = vmul.f32 %v752, %v1322
    %v1425 = vmul.f32 %v753, %v1324
    %v1426 = vmul.f32 %v754, %v1326
    %v1427 = vmul.f32 %v755, %v1328
    %v1428 = vmul.f32 %v756, %v1330
    %v1429 = vmul.f32 %v757, %v1332
    %v1430 = vmul.f32 %v758, %v1334
    %v1431 = vmul.f32 %v759, %v1336
    %v1432 = vmul.f32 %v760, %v1338
    %v1433 = vmul.f32 %v761, %v1340
    %v1434 = vmul.f32 %v762, %v1342
    %v1435 = vmul.f32 %v763, %v1344
    %v1436 = vmul.f32 %v764, %v1346
    %v1437 = vmul.f32 %v765, %v1348
    %v1438 = vmul.f32 %v766, %v1350
    %v1439 = vmul.f32 %v767, %v1352
    %v1440 = vmul.f32 %v768, %v1354
    %v1441 = vmul.f32 %v769, %v1356
    %v1442 = vmul.f32 %v770, %v1358
    %v1443 = vmul.f32 %v771, %v1360
    %v1444 = vmul.f32 %v772, %v1362
    %v1445 = vmul.f32 %v773, %v1364
    %v1446 = vmul.f32 %v774, %v1366
    %v1447 = vmul.f32 %v775, %v1368
    %v1448 = vmul.f32 %v776, %v1370
    %v1449 = vmul.f32 %v777, %v1372
    %v1450 = vmul.f32 %v778, %v1374
    %v1451 = vmul.f32 %v779, %v1376
    %v1452 = vmul.f32 %v780, %v1378
    %v1453 = vmul.f32 %v781, %v1380
    %v1454 = vmul.f32 %v782, %v1382
    %v1455 = vmul.f32 %v783, %v1384
    %v1456 = vmul.f32 %v784, %v1386
    %v1457 = vmul.f32 %v785, %v1388
    %v1458 = vmul.f32 %v786, %v1390
    %v1459 = vmul.f32 %v787, %v1392
    %v1460 = vmul.f32 %v788, %v1394
    %v1461 = vmul.f32 %v789, %v1396
    %v1462 = vmul.f32 %v790, %v1398
    %v1463 = vld [vmem:[#allocation3] sm:$0xff]
    %v1464 = vld [vmem:[#allocation3 + $0x8] sm:$0xff]
    %v1465 = vld [vmem:[#allocation3 + $0x10] sm:$0xff]
    %v1466 = vld [vmem:[#allocation3 + $0x18] sm:$0xff]
    %v1467 = vld [vmem:[#allocation3 + $0x20] sm:$0xff]
    %v1468 = vld [vmem:[#allocation3 + $0x28] sm:$0xff]
    %v1469 = vld [vmem:[#allocation3 + $0x30] sm:$0xff]
    %v1470 = vld [vmem:[#allocation3 + $0x38] sm:$0xff]
    %v1471 = vld [vmem:[#allocation3 + $0x40] sm:$0xff]
    %v1472 = vld [vmem:[#allocation3 + $0x48] sm:$0xff]
    %v1473 = vld [vmem:[#allocation3 + $0x50] sm:$0xff]
    %v1474 = vld [vmem:[#allocation3 + $0x58] sm:$0xff]
    %v1475 = vld [vmem:[#allocation3 + $0x60] sm:$0xff]
    %v1476 = vld [vmem:[#allocation3 + $0x68] sm:$0xff]
    %v1477 = vld [vmem:[#allocation3 + $0x70] sm:$0xff]
    %v1478 = vld [vmem:[#allocation3 + $0x78] sm:$0xff]
    %v1479 = vld [vmem:[#allocation3 + $0x80] sm:$0xff]
    %v1480 = vld [vmem:[#allocation3 + $0x88] sm:$0xff]
    %v1481 = vld [vmem:[#allocation3 + $0x90] sm:$0xff]
    %v1482 = vld [vmem:[#allocation3 + $0x98] sm:$0xff]
    %v1483 = vld [vmem:[#allocation3 + $0xa0] sm:$0xff]
    %v1484 = vld [vmem:[#allocation3 + $0xa8] sm:$0xff]
    %v1485 = vld [vmem:[#allocation3 + $0xb0] sm:$0xff]
    %v1486 = vld [vmem:[#allocation3 + $0xb8] sm:$0xff]
    %v1487 = vld [vmem:[#allocation3 + $0xc0] sm:$0xff]
    %v1488 = vld [vmem:[#allocation3 + $0xc8] sm:$0xff]
    %v1489 = vld [vmem:[#allocation3 + $0xd0] sm:$0xff]
    %v1490 = vld [vmem:[#allocation3 + $0xd8] sm:$0xff]
    %v1491 = vld [vmem:[#allocation3 + $0xe0] sm:$0xff]
    %v1492 = vld [vmem:[#allocation3 + $0xe8] sm:$0xff]
    %v1493 = vld [vmem:[#allocation3 + $0xf0] sm:$0xff]
    %v1494 = vld [vmem:[#allocation3 + $0xf8] sm:$0xff]
    %v1495 = vmul.f32 %v984, %v1463
    %v1496 = vmul.f32 %v986, %v1464
    %v1497 = vmul.f32 %v988, %v1465
    %v1498 = vmul.f32 %v990, %v1466
    %v1499 = vmul.f32 %v992, %v1467
    %v1500 = vmul.f32 %v994, %v1468
    %v1501 = vmul.f32 %v996, %v1469
    %v1502 = vmul.f32 %v998, %v1470
    %v1503 = vmul.f32 %v1000, %v1471
    %v1504 = vmul.f32 %v1002, %v1472
    %v1505 = vmul.f32 %v1004, %v1473
    %v1506 = vmul.f32 %v1006, %v1474
    %v1507 = vmul.f32 %v1008, %v1475
    %v1508 = vmul.f32 %v1010, %v1476
    %v1509 = vmul.f32 %v1012, %v1477
    %v1510 = vmul.f32 %v1014, %v1478
    %v1511 = vmul.f32 %v1016, %v1479
    %v1512 = vmul.f32 %v1018, %v1480
    %v1513 = vmul.f32 %v1020, %v1481
    %v1514 = vmul.f32 %v1022, %v1482
    %v1515 = vmul.f32 %v1024, %v1483
    %v1516 = vmul.f32 %v1026, %v1484
    %v1517 = vmul.f32 %v1028, %v1485
    %v1518 = vmul.f32 %v1030, %v1486
    %v1519 = vmul.f32 %v1032, %v1487
    %v1520 = vmul.f32 %v1034, %v1488
    %v1521 = vmul.f32 %v1036, %v1489
    %v1522 = vmul.f32 %v1038, %v1490
    %v1523 = vmul.f32 %v1040, %v1491
    %v1524 = vmul.f32 %v1042, %v1492
    %v1525 = vmul.f32 %v1044, %v1493
    %v1526 = vmul.f32 %v1046, %v1494
    %v1527 = vadd.f32 %v1399, %v1400
    %1528 = vadd.xlane.f32.xlu0 %v1527
    %v1529 = vpop.xlane.xlu0 %1528
    %v1530 = vadd.f32 %v1401, %v1402
    %1531 = vadd.xlane.f32.xlu0 %v1530
    %v1532 = vpop.xlane.xlu0 %1531
    %v1533 = vadd.f32 %v1403, %v1404
    %1534 = vadd.xlane.f32.xlu0 %v1533
    %v1535 = vpop.xlane.xlu0 %1534
    %v1536 = vadd.f32 %v1405, %v1406
    %1537 = vadd.xlane.f32.xlu0 %v1536
    %v1538 = vpop.xlane.xlu0 %1537
    %v1539 = vadd.f32 %v1407, %v1408
    %1540 = vadd.xlane.f32.xlu0 %v1539
    %v1541 = vpop.xlane.xlu0 %1540
    %v1542 = vadd.f32 %v1409, %v1410
    %1543 = vadd.xlane.f32.xlu0 %v1542
    %v1544 = vpop.xlane.xlu0 %1543
    %v1545 = vadd.f32 %v1411, %v1412
    %1546 = vadd.xlane.f32.xlu0 %v1545
    %v1547 = vpop.xlane.xlu0 %1546
    %v1548 = vadd.f32 %v1413, %v1414
    %1549 = vadd.xlane.f32.xlu0 %v1548
    %v1550 = vpop.xlane.xlu0 %1549
    %v1551 = vadd.f32 %v1415, %v1416
    %1552 = vadd.xlane.f32.xlu0 %v1551
    %v1553 = vpop.xlane.xlu0 %1552
    %v1554 = vadd.f32 %v1417, %v1418
    %1555 = vadd.xlane.f32.xlu0 %v1554
    %v1556 = vpop.xlane.xlu0 %1555
    %v1557 = vadd.f32 %v1419, %v1420
    %1558 = vadd.xlane.f32.xlu0 %v1557
    %v1559 = vpop.xlane.xlu0 %1558
    %v1560 = vadd.f32 %v1421, %v1422
    %1561 = vadd.xlane.f32.xlu0 %v1560
    %v1562 = vpop.xlane.xlu0 %1561
    %v1563 = vadd.f32 %v1423, %v1424
    %1564 = vadd.xlane.f32.xlu0 %v1563
    %v1565 = vpop.xlane.xlu0 %1564
    %v1566 = vadd.f32 %v1425, %v1426
    %1567 = vadd.xlane.f32.xlu0 %v1566
    %v1568 = vpop.xlane.xlu0 %1567
    %v1569 = vadd.f32 %v1427, %v1428
    %1570 = vadd.xlane.f32.xlu0 %v1569
    %v1571 = vpop.xlane.xlu0 %1570
    %v1572 = vadd.f32 %v1429, %v1430
    %1573 = vadd.xlane.f32.xlu0 %v1572
    %v1574 = vpop.xlane.xlu0 %1573
    %v1575 = vadd.f32 %v1431, %v1432
    %1576 = vadd.xlane.f32.xlu0 %v1575
    %v1577 = vpop.xlane.xlu0 %1576
    %v1578 = vadd.f32 %v1433, %v1434
    %1579 = vadd.xlane.f32.xlu0 %v1578
    %v1580 = vpop.xlane.xlu0 %1579
    %v1581 = vadd.f32 %v1435, %v1436
    %1582 = vadd.xlane.f32.xlu0 %v1581
    %v1583 = vpop.xlane.xlu0 %1582
    %v1584 = vadd.f32 %v1437, %v1438
    %1585 = vadd.xlane.f32.xlu0 %v1584
    %v1586 = vpop.xlane.xlu0 %1585
    %v1587 = vadd.f32 %v1439, %v1440
    %1588 = vadd.xlane.f32.xlu0 %v1587
    %v1589 = vpop.xlane.xlu0 %1588
    %v1590 = vadd.f32 %v1441, %v1442
    %1591 = vadd.xlane.f32.xlu0 %v1590
    %v1592 = vpop.xlane.xlu0 %1591
    %v1593 = vadd.f32 %v1443, %v1444
    %1594 = vadd.xlane.f32.xlu0 %v1593
    %v1595 = vpop.xlane.xlu0 %1594
    %v1596 = vadd.f32 %v1445, %v1446
    %1597 = vadd.xlane.f32.xlu0 %v1596
    %v1598 = vpop.xlane.xlu0 %1597
    %v1599 = vadd.f32 %v1447, %v1448
    %1600 = vadd.xlane.f32.xlu0 %v1599
    %v1601 = vpop.xlane.xlu0 %1600
    %v1602 = vadd.f32 %v1449, %v1450
    %1603 = vadd.xlane.f32.xlu0 %v1602
    %v1604 = vpop.xlane.xlu0 %1603
    %v1605 = vadd.f32 %v1451, %v1452
    %1606 = vadd.xlane.f32.xlu0 %v1605
    %v1607 = vpop.xlane.xlu0 %1606
    %v1608 = vadd.f32 %v1453, %v1454
    %1609 = vadd.xlane.f32.xlu0 %v1608
    %v1610 = vpop.xlane.xlu0 %1609
    %v1611 = vadd.f32 %v1455, %v1456
    %1612 = vadd.xlane.f32.xlu0 %v1611
    %v1613 = vpop.xlane.xlu0 %1612
    %v1614 = vadd.f32 %v1457, %v1458
    %1615 = vadd.xlane.f32.xlu0 %v1614
    %v1616 = vpop.xlane.xlu0 %1615
    %v1617 = vadd.f32 %v1459, %v1460
    %1618 = vadd.xlane.f32.xlu0 %v1617
    %v1619 = vpop.xlane.xlu0 %1618
    %v1620 = vadd.f32 %v1461, %v1462
    %1621 = vadd.xlane.f32.xlu0 %v1620
    %v1622 = vpop.xlane.xlu0 %1621
    %v1623 = vadd.f32 %v1495, %v1529
    %v1624 = vadd.f32 %v1496, %v1532
    %v1625 = vadd.f32 %v1497, %v1535
    %v1626 = vadd.f32 %v1498, %v1538
    %v1627 = vadd.f32 %v1499, %v1541
    %v1628 = vadd.f32 %v1500, %v1544
    %v1629 = vadd.f32 %v1501, %v1547
    %v1630 = vadd.f32 %v1502, %v1550
    %v1631 = vadd.f32 %v1503, %v1553
    %v1632 = vadd.f32 %v1504, %v1556
    %v1633 = vadd.f32 %v1505, %v1559
    %v1634 = vadd.f32 %v1506, %v1562
    %v1635 = vadd.f32 %v1507, %v1565
    %v1636 = vadd.f32 %v1508, %v1568
    %v1637 = vadd.f32 %v1509, %v1571
    %v1638 = vadd.f32 %v1510, %v1574
    %v1639 = vadd.f32 %v1511, %v1577
    %v1640 = vadd.f32 %v1512, %v1580
    %v1641 = vadd.f32 %v1513, %v1583
    %v1642 = vadd.f32 %v1514, %v1586
    %v1643 = vadd.f32 %v1515, %v1589
    %v1644 = vadd.f32 %v1516, %v1592
    %v1645 = vadd.f32 %v1517, %v1595
    %v1646 = vadd.f32 %v1518, %v1598
    %v1647 = vadd.f32 %v1519, %v1601
    %v1648 = vadd.f32 %v1520, %v1604
    %v1649 = vadd.f32 %v1521, %v1607
    %v1650 = vadd.f32 %v1522, %v1610
    %v1651 = vadd.f32 %v1523, %v1613
    %v1652 = vadd.f32 %v1524, %v1616
    %v1653 = vadd.f32 %v1525, %v1619
    %v1654 = vadd.f32 %v1526, %v1622
    %vm1655 = vcmask 7168
    %1656 = vst.msk [vmem:[#allocation3] sm:$0xff] %vm1655, %v1623
    %1657 = vst.msk [vmem:[#allocation3 + $0x8] sm:$0xff] %vm1655, %v1624
    %1658 = vst.msk [vmem:[#allocation3 + $0x10] sm:$0xff] %vm1655, %v1625
    %1659 = vst.msk [vmem:[#allocation3 + $0x18] sm:$0xff] %vm1655, %v1626
    %1660 = vst.msk [vmem:[#allocation3 + $0x20] sm:$0xff] %vm1655, %v1627
    %1661 = vst.msk [vmem:[#allocation3 + $0x28] sm:$0xff] %vm1655, %v1628
    %1662 = vst.msk [vmem:[#allocation3 + $0x30] sm:$0xff] %vm1655, %v1629
    %1663 = vst.msk [vmem:[#allocation3 + $0x38] sm:$0xff] %vm1655, %v1630
    %1664 = vst.msk [vmem:[#allocation3 + $0x40] sm:$0xff] %vm1655, %v1631
    %1665 = vst.msk [vmem:[#allocation3 + $0x48] sm:$0xff] %vm1655, %v1632
    %1666 = vst.msk [vmem:[#allocation3 + $0x50] sm:$0xff] %vm1655, %v1633
    %1667 = vst.msk [vmem:[#allocation3 + $0x58] sm:$0xff] %vm1655, %v1634
    %1668 = vst.msk [vmem:[#allocation3 + $0x60] sm:$0xff] %vm1655, %v1635
    %1669 = vst.msk [vmem:[#allocation3 + $0x68] sm:$0xff] %vm1655, %v1636
    %1670 = vst.msk [vmem:[#allocation3 + $0x70] sm:$0xff] %vm1655, %v1637
    %1671 = vst.msk [vmem:[#allocation3 + $0x78] sm:$0xff] %vm1655, %v1638
    %1672 = vst.msk [vmem:[#allocation3 + $0x80] sm:$0xff] %vm1655, %v1639
    %1673 = vst.msk [vmem:[#allocation3 + $0x88] sm:$0xff] %vm1655, %v1640
    %1674 = vst.msk [vmem:[#allocation3 + $0x90] sm:$0xff] %vm1655, %v1641
    %1675 = vst.msk [vmem:[#allocation3 + $0x98] sm:$0xff] %vm1655, %v1642
    %1676 = vst.msk [vmem:[#allocation3 + $0xa0] sm:$0xff] %vm1655, %v1643
    %1677 = vst.msk [vmem:[#allocation3 + $0xa8] sm:$0xff] %vm1655, %v1644
    %1678 = vst.msk [vmem:[#allocation3 + $0xb0] sm:$0xff] %vm1655, %v1645
    %1679 = vst.msk [vmem:[#allocation3 + $0xb8] sm:$0xff] %vm1655, %v1646
    %1680 = vst.msk [vmem:[#allocation3 + $0xc0] sm:$0xff] %vm1655, %v1647
    %1681 = vst.msk [vmem:[#allocation3 + $0xc8] sm:$0xff] %vm1655, %v1648
    %1682 = vst.msk [vmem:[#allocation3 + $0xd0] sm:$0xff] %vm1655, %v1649
    %1683 = vst.msk [vmem:[#allocation3 + $0xd8] sm:$0xff] %vm1655, %v1650
    %1684 = vst.msk [vmem:[#allocation3 + $0xe0] sm:$0xff] %vm1655, %v1651
    %1685 = vst.msk [vmem:[#allocation3 + $0xe8] sm:$0xff] %vm1655, %v1652
    %1686 = vst.msk [vmem:[#allocation3 + $0xf0] sm:$0xff] %vm1655, %v1653
    %1687 = vst.msk [vmem:[#allocation3 + $0xf8] sm:$0xff] %vm1655, %v1654
    %v1688 = vld [vmem:[#allocation4] sm:$0xff]
    %v1689 = vld [vmem:[#allocation4 + $0x8] sm:$0xff]
    %v1690 = vld [vmem:[#allocation4 + $0x10] sm:$0xff]
    %v1691 = vld [vmem:[#allocation4 + $0x18] sm:$0xff]
    %v1692 = vld [vmem:[#allocation4 + $0x20] sm:$0xff]
    %v1693 = vld [vmem:[#allocation4 + $0x28] sm:$0xff]
    %v1694 = vld [vmem:[#allocation4 + $0x30] sm:$0xff]
    %v1695 = vld [vmem:[#allocation4 + $0x38] sm:$0xff]
    %v1696 = vld [vmem:[#allocation4 + $0x40] sm:$0xff]
    %v1697 = vld [vmem:[#allocation4 + $0x48] sm:$0xff]
    %v1698 = vld [vmem:[#allocation4 + $0x50] sm:$0xff]
    %v1699 = vld [vmem:[#allocation4 + $0x58] sm:$0xff]
    %v1700 = vld [vmem:[#allocation4 + $0x60] sm:$0xff]
    %v1701 = vld [vmem:[#allocation4 + $0x68] sm:$0xff]
    %v1702 = vld [vmem:[#allocation4 + $0x70] sm:$0xff]
    %v1703 = vld [vmem:[#allocation4 + $0x78] sm:$0xff]
    %v1704 = vld [vmem:[#allocation4 + $0x80] sm:$0xff]
    %v1705 = vld [vmem:[#allocation4 + $0x88] sm:$0xff]
    %v1706 = vld [vmem:[#allocation4 + $0x90] sm:$0xff]
    %v1707 = vld [vmem:[#allocation4 + $0x98] sm:$0xff]
    %v1708 = vld [vmem:[#allocation4 + $0xa0] sm:$0xff]
    %v1709 = vld [vmem:[#allocation4 + $0xa8] sm:$0xff]
    %v1710 = vld [vmem:[#allocation4 + $0xb0] sm:$0xff]
    %v1711 = vld [vmem:[#allocation4 + $0xb8] sm:$0xff]
    %v1712 = vld [vmem:[#allocation4 + $0xc0] sm:$0xff]
    %v1713 = vld [vmem:[#allocation4 + $0xc8] sm:$0xff]
    %v1714 = vld [vmem:[#allocation4 + $0xd0] sm:$0xff]
    %v1715 = vld [vmem:[#allocation4 + $0xd8] sm:$0xff]
    %v1716 = vld [vmem:[#allocation4 + $0xe0] sm:$0xff]
    %v1717 = vld [vmem:[#allocation4 + $0xe8] sm:$0xff]
    %v1718 = vld [vmem:[#allocation4 + $0xf0] sm:$0xff]
    %v1719 = vld [vmem:[#allocation4 + $0xf8] sm:$0xff]
    %1721 = vset.pattern.permute.xlu0 0
    %1722 = vperm.xlu0 %1721, %v984
    %v1723 = vpop.permute.xlu0 %1722
    %1726 = vset.pattern.permute.xlu0 0
    %1727 = vperm.xlu0 %1726, %v986
    %v1728 = vpop.permute.xlu0 %1727
    %1731 = vset.pattern.permute.xlu0 0
    %1732 = vperm.xlu0 %1731, %v988
    %v1733 = vpop.permute.xlu0 %1732
    %1736 = vset.pattern.permute.xlu0 0
    %1737 = vperm.xlu0 %1736, %v990
    %v1738 = vpop.permute.xlu0 %1737
    %1741 = vset.pattern.permute.xlu0 0
    %1742 = vperm.xlu0 %1741, %v992
    %v1743 = vpop.permute.xlu0 %1742
    %1746 = vset.pattern.permute.xlu0 0
    %1747 = vperm.xlu0 %1746, %v994
    %v1748 = vpop.permute.xlu0 %1747
    %1751 = vset.pattern.permute.xlu0 0
    %1752 = vperm.xlu0 %1751, %v996
    %v1753 = vpop.permute.xlu0 %1752
    %1756 = vset.pattern.permute.xlu0 0
    %1757 = vperm.xlu0 %1756, %v998
    %v1758 = vpop.permute.xlu0 %1757
    %1761 = vset.pattern.permute.xlu0 0
    %1762 = vperm.xlu0 %1761, %v1000
    %v1763 = vpop.permute.xlu0 %1762
    %1766 = vset.pattern.permute.xlu0 0
    %1767 = vperm.xlu0 %1766, %v1002
    %v1768 = vpop.permute.xlu0 %1767
    %1771 = vset.pattern.permute.xlu0 0
    %1772 = vperm.xlu0 %1771, %v1004
    %v1773 = vpop.permute.xlu0 %1772
    %1776 = vset.pattern.permute.xlu0 0
    %1777 = vperm.xlu0 %1776, %v1006
    %v1778 = vpop.permute.xlu0 %1777
    %1781 = vset.pattern.permute.xlu0 0
    %1782 = vperm.xlu0 %1781, %v1008
    %v1783 = vpop.permute.xlu0 %1782
    %1786 = vset.pattern.permute.xlu0 0
    %1787 = vperm.xlu0 %1786, %v1010
    %v1788 = vpop.permute.xlu0 %1787
    %1791 = vset.pattern.permute.xlu0 0
    %1792 = vperm.xlu0 %1791, %v1012
    %v1793 = vpop.permute.xlu0 %1792
    %1796 = vset.pattern.permute.xlu0 0
    %1797 = vperm.xlu0 %1796, %v1014
    %v1798 = vpop.permute.xlu0 %1797
    %1801 = vset.pattern.permute.xlu0 0
    %1802 = vperm.xlu0 %1801, %v1016
    %v1803 = vpop.permute.xlu0 %1802
    %1806 = vset.pattern.permute.xlu0 0
    %1807 = vperm.xlu0 %1806, %v1018
    %v1808 = vpop.permute.xlu0 %1807
    %1811 = vset.pattern.permute.xlu0 0
    %1812 = vperm.xlu0 %1811, %v1020
    %v1813 = vpop.permute.xlu0 %1812
    %1816 = vset.pattern.permute.xlu0 0
    %1817 = vperm.xlu0 %1816, %v1022
    %v1818 = vpop.permute.xlu0 %1817
    %1821 = vset.pattern.permute.xlu0 0
    %1822 = vperm.xlu0 %1821, %v1024
    %v1823 = vpop.permute.xlu0 %1822
    %1826 = vset.pattern.permute.xlu0 0
    %1827 = vperm.xlu0 %1826, %v1026
    %v1828 = vpop.permute.xlu0 %1827
    %1831 = vset.pattern.permute.xlu0 0
    %1832 = vperm.xlu0 %1831, %v1028
    %v1833 = vpop.permute.xlu0 %1832
    %1836 = vset.pattern.permute.xlu0 0
    %1837 = vperm.xlu0 %1836, %v1030
    %v1838 = vpop.permute.xlu0 %1837
    %1841 = vset.pattern.permute.xlu0 0
    %1842 = vperm.xlu0 %1841, %v1032
    %v1843 = vpop.permute.xlu0 %1842
    %1846 = vset.pattern.permute.xlu0 0
    %1847 = vperm.xlu0 %1846, %v1034
    %v1848 = vpop.permute.xlu0 %1847
    %1851 = vset.pattern.permute.xlu0 0
    %1852 = vperm.xlu0 %1851, %v1036
    %v1853 = vpop.permute.xlu0 %1852
    %1856 = vset.pattern.permute.xlu0 0
    %1857 = vperm.xlu0 %1856, %v1038
    %v1858 = vpop.permute.xlu0 %1857
    %1861 = vset.pattern.permute.xlu0 0
    %1862 = vperm.xlu0 %1861, %v1040
    %v1863 = vpop.permute.xlu0 %1862
    %1866 = vset.pattern.permute.xlu0 0
    %1867 = vperm.xlu0 %1866, %v1042
    %v1868 = vpop.permute.xlu0 %1867
    %1871 = vset.pattern.permute.xlu0 0
    %1872 = vperm.xlu0 %1871, %v1044
    %v1873 = vpop.permute.xlu0 %1872
    %1876 = vset.pattern.permute.xlu0 0
    %1877 = vperm.xlu0 %1876, %v1046
    %v1878 = vpop.permute.xlu0 %1877
    %v1880 = vmul.f32 %v1723, %v1688
    %v1881 = vmul.f32 %v1728, %v1689
    %v1882 = vmul.f32 %v1733, %v1690
    %v1883 = vmul.f32 %v1738, %v1691
    %v1884 = vmul.f32 %v1743, %v1692
    %v1885 = vmul.f32 %v1748, %v1693
    %v1886 = vmul.f32 %v1753, %v1694
    %v1887 = vmul.f32 %v1758, %v1695
    %v1888 = vmul.f32 %v1763, %v1696
    %v1889 = vmul.f32 %v1768, %v1697
    %v1890 = vmul.f32 %v1773, %v1698
    %v1891 = vmul.f32 %v1778, %v1699
    %v1892 = vmul.f32 %v1783, %v1700
    %v1893 = vmul.f32 %v1788, %v1701
    %v1894 = vmul.f32 %v1793, %v1702
    %v1895 = vmul.f32 %v1798, %v1703
    %v1896 = vmul.f32 %v1803, %v1704
    %v1897 = vmul.f32 %v1808, %v1705
    %v1898 = vmul.f32 %v1813, %v1706
    %v1899 = vmul.f32 %v1818, %v1707
    %v1900 = vmul.f32 %v1823, %v1708
    %v1901 = vmul.f32 %v1828, %v1709
    %v1902 = vmul.f32 %v1833, %v1710
    %v1903 = vmul.f32 %v1838, %v1711
    %v1904 = vmul.f32 %v1843, %v1712
    %v1905 = vmul.f32 %v1848, %v1713
    %v1906 = vmul.f32 %v1853, %v1714
    %v1907 = vmul.f32 %v1858, %v1715
    %v1908 = vmul.f32 %v1863, %v1716
    %v1909 = vmul.f32 %v1868, %v1717
    %v1910 = vmul.f32 %v1873, %v1718
    %v1911 = vmul.f32 %v1878, %v1719
    %v1912 = vpack.c.bf16 %v1401, %v1399
    %v1913 = vpack.c.bf16 %v1402, %v1400
    %v1914 = vpack.c.bf16 %v1405, %v1403
    %v1915 = vpack.c.bf16 %v1406, %v1404
    %v1916 = vpack.c.bf16 %v1409, %v1407
    %v1917 = vpack.c.bf16 %v1410, %v1408
    %v1918 = vpack.c.bf16 %v1413, %v1411
    %v1919 = vpack.c.bf16 %v1414, %v1412
    %v1920 = vpack.c.bf16 %v1417, %v1415
    %v1921 = vpack.c.bf16 %v1418, %v1416
    %v1922 = vpack.c.bf16 %v1421, %v1419
    %v1923 = vpack.c.bf16 %v1422, %v1420
    %v1924 = vpack.c.bf16 %v1425, %v1423
    %v1925 = vpack.c.bf16 %v1426, %v1424
    %v1926 = vpack.c.bf16 %v1429, %v1427
    %v1927 = vpack.c.bf16 %v1430, %v1428
    %v1928 = vpack.c.bf16 %v1433, %v1431
    %v1929 = vpack.c.bf16 %v1434, %v1432
    %v1930 = vpack.c.bf16 %v1437, %v1435
    %v1931 = vpack.c.bf16 %v1438, %v1436
    %v1932 = vpack.c.bf16 %v1441, %v1439
    %v1933 = vpack.c.bf16 %v1442, %v1440
    %v1934 = vpack.c.bf16 %v1445, %v1443
    %v1935 = vpack.c.bf16 %v1446, %v1444
    %v1936 = vpack.c.bf16 %v1449, %v1447
    %v1937 = vpack.c.bf16 %v1450, %v1448
    %v1938 = vpack.c.bf16 %v1453, %v1451
    %v1939 = vpack.c.bf16 %v1454, %v1452
    %v1940 = vpack.c.bf16 %v1457, %v1455
    %v1941 = vpack.c.bf16 %v1458, %v1456
    %v1942 = vpack.c.bf16 %v1461, %v1459
    %v1943 = vpack.c.bf16 %v1462, %v1460
    %v1944 = vld [vmem:[#allocation5] sm:$0xf]
    %v1945 = vld [vmem:[#allocation5 + $0x4] sm:$0xf]
    %v1946 = vld [vmem:[#allocation5 + $0x8] sm:$0xf]
    %v1947 = vld [vmem:[#allocation5 + $0xc] sm:$0xf]
    %v1948 = vld [vmem:[#allocation5 + $0x10] sm:$0xf]
    %v1949 = vld [vmem:[#allocation5 + $0x14] sm:$0xf]
    %v1950 = vld [vmem:[#allocation5 + $0x18] sm:$0xf]
    %v1951 = vld [vmem:[#allocation5 + $0x1c] sm:$0xf]
    %v1952 = vld [vmem:[#allocation5 + $0x20] sm:$0xf]
    %v1953 = vld [vmem:[#allocation5 + $0x24] sm:$0xf]
    %v1954 = vld [vmem:[#allocation5 + $0x28] sm:$0xf]
    %v1955 = vld [vmem:[#allocation5 + $0x2c] sm:$0xf]
    %v1956 = vld [vmem:[#allocation5 + $0x30] sm:$0xf]
    %v1957 = vld [vmem:[#allocation5 + $0x34] sm:$0xf]
    %v1958 = vld [vmem:[#allocation5 + $0x38] sm:$0xf]
    %v1959 = vld [vmem:[#allocation5 + $0x3c] sm:$0xf]
    %v1960 = vld [vmem:[#allocation5 + $0x40] sm:$0xf]
    %v1961 = vld [vmem:[#allocation5 + $0x44] sm:$0xf]
    %v1962 = vld [vmem:[#allocation5 + $0x48] sm:$0xf]
    %v1963 = vld [vmem:[#allocation5 + $0x4c] sm:$0xf]
    %v1964 = vld [vmem:[#allocation5 + $0x50] sm:$0xf]
    %v1965 = vld [vmem:[#allocation5 + $0x54] sm:$0xf]
    %v1966 = vld [vmem:[#allocation5 + $0x58] sm:$0xf]
    %v1967 = vld [vmem:[#allocation5 + $0x5c] sm:$0xf]
    %v1968 = vld [vmem:[#allocation5 + $0x60] sm:$0xf]
    %v1969 = vld [vmem:[#allocation5 + $0x64] sm:$0xf]
    %v1970 = vld [vmem:[#allocation5 + $0x68] sm:$0xf]
    %v1971 = vld [vmem:[#allocation5 + $0x6c] sm:$0xf]
    %v1972 = vld [vmem:[#allocation5 + $0x70] sm:$0xf]
    %v1973 = vld [vmem:[#allocation5 + $0x74] sm:$0xf]
    %v1974 = vld [vmem:[#allocation5 + $0x78] sm:$0xf]
    %v1975 = vld [vmem:[#allocation5 + $0x7c] sm:$0xf]
    %v2008 = vunpack.c.l.b16 %v1944
    %v2009 = vunpack.c.l.b16 %v1945
    %v2010 = vunpack.c.l.b16 %v1946
    %v2011 = vunpack.c.l.b16 %v1947
    %v2012 = vunpack.c.l.b16 %v1948
    %v2013 = vunpack.c.l.b16 %v1949
    %v2014 = vunpack.c.l.b16 %v1950
    %v2015 = vunpack.c.l.b16 %v1951
    %v2016 = vunpack.c.l.b16 %v1952
    %v2017 = vunpack.c.l.b16 %v1953
    %v2018 = vunpack.c.l.b16 %v1954
    %v2019 = vunpack.c.l.b16 %v1955
    %v2020 = vunpack.c.l.b16 %v1956
    %v2021 = vunpack.c.l.b16 %v1957
    %v2022 = vunpack.c.l.b16 %v1958
    %v2023 = vunpack.c.l.b16 %v1959
    %v2024 = vunpack.c.l.b16 %v1960
    %v2025 = vunpack.c.l.b16 %v1961
    %v2026 = vunpack.c.l.b16 %v1962
    %v2027 = vunpack.c.l.b16 %v1963
    %v2028 = vunpack.c.l.b16 %v1964
    %v2029 = vunpack.c.l.b16 %v1965
    %v2030 = vunpack.c.l.b16 %v1966
    %v2031 = vunpack.c.l.b16 %v1967
    %v2032 = vunpack.c.l.b16 %v1968
    %v2033 = vunpack.c.l.b16 %v1969
    %v2034 = vunpack.c.l.b16 %v1970
    %v2035 = vunpack.c.l.b16 %v1971
    %v2036 = vunpack.c.l.b16 %v1972
    %v2037 = vunpack.c.l.b16 %v1973
    %v2038 = vunpack.c.l.b16 %v1974
    %v2039 = vunpack.c.l.b16 %v1975
    %v2040 = vpack.c.b16 %v2009, %v2008
    %v2041 = vpack.c.b16 %v2011, %v2010
    %v2042 = vpack.c.b16 %v2013, %v2012
    %v2043 = vpack.c.b16 %v2015, %v2014
    %v2044 = vpack.c.b16 %v2017, %v2016
    %v2045 = vpack.c.b16 %v2019, %v2018
    %v2046 = vpack.c.b16 %v2021, %v2020
    %v2047 = vpack.c.b16 %v2023, %v2022
    %v2048 = vpack.c.b16 %v2025, %v2024
    %v2049 = vpack.c.b16 %v2027, %v2026
    %v2050 = vpack.c.b16 %v2029, %v2028
    %v2051 = vpack.c.b16 %v2031, %v2030
    %v2052 = vpack.c.b16 %v2033, %v2032
    %v2053 = vpack.c.b16 %v2035, %v2034
    %v2054 = vpack.c.b16 %v2037, %v2036
    %v2055 = vpack.c.b16 %v2039, %v2038
    %2072 = vmatprep.subr.bf16.mxu0 0
    %2073 = vmatpush1.bf16.msra.mxu0 %v2040
    %2074 = vmatprep.subr.bf16.mxu0 0
    %2075 = vmatpush1.bf16.msra.mxu0 %v2041
    %2076 = vmatprep.subr.bf16.mxu0 0
    %2077 = vmatpush1.bf16.msra.mxu0 %v2042
    %2078 = vmatprep.subr.bf16.mxu0 0
    %2079 = vmatpush1.bf16.msra.mxu0 %v2043
    %2080 = vmatprep.subr.bf16.mxu0 0
    %2081 = vmatpush1.bf16.msra.mxu0 %v2044
    %2082 = vmatprep.subr.bf16.mxu0 0
    %2083 = vmatpush1.bf16.msra.mxu0 %v2045
    %2084 = vmatprep.subr.bf16.mxu0 0
    %2085 = vmatpush1.bf16.msra.mxu0 %v2046
    %2086 = vmatprep.subr.bf16.mxu0 0
    %2087 = vmatpush1.bf16.msra.mxu0 %v2047
    %2088 = vmatprep.subr.bf16.mxu0 0
    %2089 = vmatpush1.bf16.msra.mxu0 %v2048
    %2090 = vmatprep.subr.bf16.mxu0 0
    %2091 = vmatpush1.bf16.msra.mxu0 %v2049
    %2092 = vmatprep.subr.bf16.mxu0 0
    %2093 = vmatpush1.bf16.msra.mxu0 %v2050
    %2094 = vmatprep.subr.bf16.mxu0 0
    %2095 = vmatpush1.bf16.msra.mxu0 %v2051
    %2096 = vmatprep.subr.bf16.mxu0 0
    %2097 = vmatpush1.bf16.msra.mxu0 %v2052
    %2098 = vmatprep.subr.bf16.mxu0 0
    %2099 = vmatpush1.bf16.msra.mxu0 %v2053
    %2100 = vmatprep.subr.bf16.mxu0 0
    %2101 = vmatpush1.bf16.msra.mxu0 %v2054
    %2102 = vmatprep.subr.bf16.mxu0 0
    %2103 = vmatpush1.bf16.msra.mxu0 %v2055
    %2104 = vmatprep.mubr.bf16.mxu0 %v1913
    %2105 = vmatmul.mubr.bf16.gmra.mrb[0].mxu0 %v1912
    %v2106 = vpop.f32.mrb[0].mxu0
    %v2107 = vadd.f32 0.0, %v2106
    %v2108 = vpop.f32.mrb[0].mxu0
    %v2109 = vpop.f32.mrb[0].mxu0
    %v2110 = vadd.f32 0.0, %v2109
    %v2111 = vpop.f32.mrb[0].mxu0
    %2112 = vmatprep.mubr.bf16.mxu0 %v1915
    %2113 = vmatmul.mubr.bf16.gmra.mrb[0].mxu0 %v1914
    %v2114 = vpop.f32.mrb[0].mxu0
    %v2115 = vadd.f32 0.0, %v2114
    %v2116 = vpop.f32.mrb[0].mxu0
    %v2117 = vpop.f32.mrb[0].mxu0
    %v2118 = vadd.f32 0.0, %v2117
    %v2119 = vpop.f32.mrb[0].mxu0
    %2120 = vmatprep.mubr.bf16.mxu0 %v1917
    %2121 = vmatmul.mubr.bf16.gmra.mrb[0].mxu0 %v1916
    %v2122 = vpop.f32.mrb[0].mxu0
    %v2123 = vadd.f32 0.0, %v2122
    %v2124 = vpop.f32.mrb[0].mxu0
    %v2125 = vpop.f32.mrb[0].mxu0
    %v2126 = vadd.f32 0.0, %v2125
    %v2127 = vpop.f32.mrb[0].mxu0
    %2128 = vmatprep.mubr.bf16.mxu0 %v1919
    %2129 = vmatmul.mubr.bf16.gmra.mrb[0].mxu0 %v1918
    %v2130 = vpop.f32.mrb[0].mxu0
    %v2131 = vadd.f32 0.0, %v2130
    %v2132 = vpop.f32.mrb[0].mxu0
    %v2133 = vpop.f32.mrb[0].mxu0
    %v2134 = vadd.f32 0.0, %v2133
    %v2135 = vpop.f32.mrb[0].mxu0
    %2136 = vmatprep.mubr.bf16.mxu0 %v1921
    %2137 = vmatmul.mubr.bf16.gmra.mrb[0].mxu0 %v1920
    %v2138 = vpop.f32.mrb[0].mxu0
    %v2139 = vadd.f32 0.0, %v2138
    %v2140 = vpop.f32.mrb[0].mxu0
    %v2141 = vpop.f32.mrb[0].mxu0
    %v2142 = vadd.f32 0.0, %v2141
    %v2143 = vpop.f32.mrb[0].mxu0
    %2144 = vmatprep.mubr.bf16.mxu0 %v1923
    %2145 = vmatmul.mubr.bf16.gmra.mrb[0].mxu0 %v1922
    %v2146 = vpop.f32.mrb[0].mxu0
    %v2147 = vadd.f32 0.0, %v2146
    %v2148 = vpop.f32.mrb[0].mxu0
    %v2149 = vpop.f32.mrb[0].mxu0
    %v2150 = vadd.f32 0.0, %v2149
    %v2151 = vpop.f32.mrb[0].mxu0
    %2152 = vmatprep.mubr.bf16.mxu0 %v1925
    %2153 = vmatmul.mubr.bf16.gmra.mrb[0].mxu0 %v1924
    %v2154 = vpop.f32.mrb[0].mxu0
    %v2155 = vadd.f32 0.0, %v2154
    %v2156 = vpop.f32.mrb[0].mxu0
    %v2157 = vpop.f32.mrb[0].mxu0
    %v2158 = vadd.f32 0.0, %v2157
    %v2159 = vpop.f32.mrb[0].mxu0
    %2160 = vmatprep.mubr.bf16.mxu0 %v1927
    %2161 = vmatmul.mubr.bf16.gmra.mrb[0].mxu0 %v1926
    %v2162 = vpop.f32.mrb[0].mxu0
    %v2163 = vadd.f32 0.0, %v2162
    %v2164 = vpop.f32.mrb[0].mxu0
    %v2165 = vpop.f32.mrb[0].mxu0
    %v2166 = vadd.f32 0.0, %v2165
    %v2167 = vpop.f32.mrb[0].mxu0
    %2168 = vmatprep.mubr.bf16.mxu0 %v1929
    %2169 = vmatmul.mubr.bf16.gmra.mrb[0].mxu0 %v1928
    %v2170 = vpop.f32.mrb[0].mxu0
    %v2171 = vadd.f32 0.0, %v2170
    %v2172 = vpop.f32.mrb[0].mxu0
    %v2173 = vpop.f32.mrb[0].mxu0
    %v2174 = vadd.f32 0.0, %v2173
    %v2175 = vpop.f32.mrb[0].mxu0
    %2176 = vmatprep.mubr.bf16.mxu0 %v1931
    %2177 = vmatmul.mubr.bf16.gmra.mrb[0].mxu0 %v1930
    %v2178 = vpop.f32.mrb[0].mxu0
    %v2179 = vadd.f32 0.0, %v2178
    %v2180 = vpop.f32.mrb[0].mxu0
    %v2181 = vpop.f32.mrb[0].mxu0
    %v2182 = vadd.f32 0.0, %v2181
    %v2183 = vpop.f32.mrb[0].mxu0
    %2184 = vmatprep.mubr.bf16.mxu0 %v1933
    %2185 = vmatmul.mubr.bf16.gmra.mrb[0].mxu0 %v1932
    %v2186 = vpop.f32.mrb[0].mxu0
    %v2187 = vadd.f32 0.0, %v2186
    %v2188 = vpop.f32.mrb[0].mxu0
    %v2189 = vpop.f32.mrb[0].mxu0
    %v2190 = vadd.f32 0.0, %v2189
    %v2191 = vpop.f32.mrb[0].mxu0
    %2192 = vmatprep.mubr.bf16.mxu0 %v1935
    %2193 = vmatmul.mubr.bf16.gmra.mrb[0].mxu0 %v1934
    %v2194 = vpop.f32.mrb[0].mxu0
    %v2195 = vadd.f32 0.0, %v2194
    %v2196 = vpop.f32.mrb[0].mxu0
    %v2197 = vpop.f32.mrb[0].mxu0
    %v2198 = vadd.f32 0.0, %v2197
    %v2199 = vpop.f32.mrb[0].mxu0
    %2200 = vmatprep.mubr.bf16.mxu0 %v1937
    %2201 = vmatmul.mubr.bf16.gmra.mrb[0].mxu0 %v1936
    %v2202 = vpop.f32.mrb[0].mxu0
    %v2203 = vadd.f32 0.0, %v2202
    %v2204 = vpop.f32.mrb[0].mxu0
    %v2205 = vpop.f32.mrb[0].mxu0
    %v2206 = vadd.f32 0.0, %v2205
    %v2207 = vpop.f32.mrb[0].mxu0
    %2208 = vmatprep.mubr.bf16.mxu0 %v1939
    %2209 = vmatmul.mubr.bf16.gmra.mrb[0].mxu0 %v1938
    %v2210 = vpop.f32.mrb[0].mxu0
    %v2211 = vadd.f32 0.0, %v2210
    %v2212 = vpop.f32.mrb[0].mxu0
    %v2213 = vpop.f32.mrb[0].mxu0
    %v2214 = vadd.f32 0.0, %v2213
    %v2215 = vpop.f32.mrb[0].mxu0
    %2216 = vmatprep.mubr.bf16.mxu0 %v1941
    %2217 = vmatmul.mubr.bf16.gmra.mrb[0].mxu0 %v1940
    %v2218 = vpop.f32.mrb[0].mxu0
    %v2219 = vadd.f32 0.0, %v2218
    %v2220 = vpop.f32.mrb[0].mxu0
    %v2221 = vpop.f32.mrb[0].mxu0
    %v2222 = vadd.f32 0.0, %v2221
    %v2223 = vpop.f32.mrb[0].mxu0
    %2224 = vmatprep.mubr.bf16.mxu0 %v1943
    %2225 = vmatmul.mubr.bf16.gmra.mrb[0].mxu0 %v1942
    %v2226 = vpop.f32.mrb[0].mxu0
    %v2227 = vadd.f32 0.0, %v2226
    %v2228 = vpop.f32.mrb[0].mxu0
    %v2229 = vpop.f32.mrb[0].mxu0
    %v2230 = vadd.f32 0.0, %v2229
    %v2231 = vpop.f32.mrb[0].mxu0
    %2232 = vdwg.mxu0
    %v2233 = vadd.f32 %v1880, %v2107
    %v2234 = vadd.f32 %v1881, %v2110
    %v2235 = vadd.f32 %v1882, %v2115
    %v2236 = vadd.f32 %v1883, %v2118
    %v2237 = vadd.f32 %v1884, %v2123
    %v2238 = vadd.f32 %v1885, %v2126
    %v2239 = vadd.f32 %v1886, %v2131
    %v2240 = vadd.f32 %v1887, %v2134
    %v2241 = vadd.f32 %v1888, %v2139
    %v2242 = vadd.f32 %v1889, %v2142
    %v2243 = vadd.f32 %v1890, %v2147
    %v2244 = vadd.f32 %v1891, %v2150
    %v2245 = vadd.f32 %v1892, %v2155
    %v2246 = vadd.f32 %v1893, %v2158
    %v2247 = vadd.f32 %v1894, %v2163
    %v2248 = vadd.f32 %v1895, %v2166
    %v2249 = vadd.f32 %v1896, %v2171
    %v2250 = vadd.f32 %v1897, %v2174
    %v2251 = vadd.f32 %v1898, %v2179
    %v2252 = vadd.f32 %v1899, %v2182
    %v2253 = vadd.f32 %v1900, %v2187
    %v2254 = vadd.f32 %v1901, %v2190
    %v2255 = vadd.f32 %v1902, %v2195
    %v2256 = vadd.f32 %v1903, %v2198
    %v2257 = vadd.f32 %v1904, %v2203
    %v2258 = vadd.f32 %v1905, %v2206
    %v2259 = vadd.f32 %v1906, %v2211
    %v2260 = vadd.f32 %v1907, %v2214
    %v2261 = vadd.f32 %v1908, %v2219
    %v2262 = vadd.f32 %v1909, %v2222
    %v2263 = vadd.f32 %v1910, %v2227
    %v2264 = vadd.f32 %v1911, %v2230
    %2265 = vst [vmem:[#allocation4] sm:$0xff] %v2233
    %2266 = vst [vmem:[#allocation4 + $0x8] sm:$0xff] %v2234
    %2267 = vst [vmem:[#allocation4 + $0x10] sm:$0xff] %v2235
    %2268 = vst [vmem:[#allocation4 + $0x18] sm:$0xff] %v2236
    %2269 = vst [vmem:[#allocation4 + $0x20] sm:$0xff] %v2237
    %2270 = vst [vmem:[#allocation4 + $0x28] sm:$0xff] %v2238
    %2271 = vst [vmem:[#allocation4 + $0x30] sm:$0xff] %v2239
    %2272 = vst [vmem:[#allocation4 + $0x38] sm:$0xff] %v2240
    %2273 = vst [vmem:[#allocation4 + $0x40] sm:$0xff] %v2241
    %2274 = vst [vmem:[#allocation4 + $0x48] sm:$0xff] %v2242
    %2275 = vst [vmem:[#allocation4 + $0x50] sm:$0xff] %v2243
    %2276 = vst [vmem:[#allocation4 + $0x58] sm:$0xff] %v2244
    %2277 = vst [vmem:[#allocation4 + $0x60] sm:$0xff] %v2245
    %2278 = vst [vmem:[#allocation4 + $0x68] sm:$0xff] %v2246
    %2279 = vst [vmem:[#allocation4 + $0x70] sm:$0xff] %v2247
    %2280 = vst [vmem:[#allocation4 + $0x78] sm:$0xff] %v2248
    %2281 = vst [vmem:[#allocation4 + $0x80] sm:$0xff] %v2249
    %2282 = vst [vmem:[#allocation4 + $0x88] sm:$0xff] %v2250
    %2283 = vst [vmem:[#allocation4 + $0x90] sm:$0xff] %v2251
    %2284 = vst [vmem:[#allocation4 + $0x98] sm:$0xff] %v2252
    %2285 = vst [vmem:[#allocation4 + $0xa0] sm:$0xff] %v2253
    %2286 = vst [vmem:[#allocation4 + $0xa8] sm:$0xff] %v2254
    %2287 = vst [vmem:[#allocation4 + $0xb0] sm:$0xff] %v2255
    %2288 = vst [vmem:[#allocation4 + $0xb8] sm:$0xff] %v2256
    %2289 = vst [vmem:[#allocation4 + $0xc0] sm:$0xff] %v2257
    %2290 = vst [vmem:[#allocation4 + $0xc8] sm:$0xff] %v2258
    %2291 = vst [vmem:[#allocation4 + $0xd0] sm:$0xff] %v2259
    %2292 = vst [vmem:[#allocation4 + $0xd8] sm:$0xff] %v2260
    %2293 = vst [vmem:[#allocation4 + $0xe0] sm:$0xff] %v2261
    %2294 = vst [vmem:[#allocation4 + $0xe8] sm:$0xff] %v2262
    %2295 = vst [vmem:[#allocation4 + $0xf0] sm:$0xff] %v2263
    %2296 = vst [vmem:[#allocation4 + $0xf8] sm:$0xff] %v2264
    %2297 = vst.msk [vmem:[#allocation2] sm:$0xff] %vm1655, %v919
    %2298 = vst.msk [vmem:[#allocation2 + $0x8] sm:$0xff] %vm1655, %v920
    %2299 = vst.msk [vmem:[#allocation2 + $0x10] sm:$0xff] %vm1655, %v921
    %2300 = vst.msk [vmem:[#allocation2 + $0x18] sm:$0xff] %vm1655, %v922
    %2301 = vst.msk [vmem:[#allocation2 + $0x20] sm:$0xff] %vm1655, %v923
    %2302 = vst.msk [vmem:[#allocation2 + $0x28] sm:$0xff] %vm1655, %v924
    %2303 = vst.msk [vmem:[#allocation2 + $0x30] sm:$0xff] %vm1655, %v925
    %2304 = vst.msk [vmem:[#allocation2 + $0x38] sm:$0xff] %vm1655, %v926
    %2305 = vst.msk [vmem:[#allocation2 + $0x40] sm:$0xff] %vm1655, %v927
    %2306 = vst.msk [vmem:[#allocation2 + $0x48] sm:$0xff] %vm1655, %v928
    %2307 = vst.msk [vmem:[#allocation2 + $0x50] sm:$0xff] %vm1655, %v929
    %2308 = vst.msk [vmem:[#allocation2 + $0x58] sm:$0xff] %vm1655, %v930
    %2309 = vst.msk [vmem:[#allocation2 + $0x60] sm:$0xff] %vm1655, %v931
    %2310 = vst.msk [vmem:[#allocation2 + $0x68] sm:$0xff] %vm1655, %v932
    %2311 = vst.msk [vmem:[#allocation2 + $0x70] sm:$0xff] %vm1655, %v933
    %2312 = vst.msk [vmem:[#allocation2 + $0x78] sm:$0xff] %vm1655, %v934
    %2313 = vst.msk [vmem:[#allocation2 + $0x80] sm:$0xff] %vm1655, %v935
    %2314 = vst.msk [vmem:[#allocation2 + $0x88] sm:$0xff] %vm1655, %v936
    %2315 = vst.msk [vmem:[#allocation2 + $0x90] sm:$0xff] %vm1655, %v937
    %2316 = vst.msk [vmem:[#allocation2 + $0x98] sm:$0xff] %vm1655, %v938
    %2317 = vst.msk [vmem:[#allocation2 + $0xa0] sm:$0xff] %vm1655, %v939
    %2318 = vst.msk [vmem:[#allocation2 + $0xa8] sm:$0xff] %vm1655, %v940
    %2319 = vst.msk [vmem:[#allocation2 + $0xb0] sm:$0xff] %vm1655, %v941
    %2320 = vst.msk [vmem:[#allocation2 + $0xb8] sm:$0xff] %vm1655, %v942
    %2321 = vst.msk [vmem:[#allocation2 + $0xc0] sm:$0xff] %vm1655, %v943
    %2322 = vst.msk [vmem:[#allocation2 + $0xc8] sm:$0xff] %vm1655, %v944
    %2323 = vst.msk [vmem:[#allocation2 + $0xd0] sm:$0xff] %vm1655, %v945
    %2324 = vst.msk [vmem:[#allocation2 + $0xd8] sm:$0xff] %vm1655, %v946
    %2325 = vst.msk [vmem:[#allocation2 + $0xe0] sm:$0xff] %vm1655, %v947
    %2326 = vst.msk [vmem:[#allocation2 + $0xe8] sm:$0xff] %vm1655, %v948
    %2327 = vst.msk [vmem:[#allocation2 + $0xf0] sm:$0xff] %vm1655, %v949
    %2328 = vst.msk [vmem:[#allocation2 + $0xf8] sm:$0xff] %vm1655, %v950
    // Predicated region
    $region46: #{tpu_custom_call.1} parent=1 // pred_check
      %p2329 = pneg %p86
    $region47: #{tpu_custom_call.1} parent=1 // pred_check_branch
      %2331 = sbr.rel (%p2329) target = $region49
    $region48: #{tpu_custom_call.1} parent=1 // pred_region
      %v2332 = vld [vmem:[#allocation3] sm:$0xff]
      %v2333 = vld [vmem:[#allocation3 + $0x8] sm:$0xff]
      %v2334 = vld [vmem:[#allocation3 + $0x10] sm:$0xff]
      %v2335 = vld [vmem:[#allocation3 + $0x18] sm:$0xff]
      %v2336 = vld [vmem:[#allocation3 + $0x20] sm:$0xff]
      %v2337 = vld [vmem:[#allocation3 + $0x28] sm:$0xff]
      %v2338 = vld [vmem:[#allocation3 + $0x30] sm:$0xff]
      %v2339 = vld [vmem:[#allocation3 + $0x38] sm:$0xff]
      %v2340 = vld [vmem:[#allocation3 + $0x40] sm:$0xff]
      %v2341 = vld [vmem:[#allocation3 + $0x48] sm:$0xff]
      %v2342 = vld [vmem:[#allocation3 + $0x50] sm:$0xff]
      %v2343 = vld [vmem:[#allocation3 + $0x58] sm:$0xff]
      %v2344 = vld [vmem:[#allocation3 + $0x60] sm:$0xff]
      %v2345 = vld [vmem:[#allocation3 + $0x68] sm:$0xff]
      %v2346 = vld [vmem:[#allocation3 + $0x70] sm:$0xff]
      %v2347 = vld [vmem:[#allocation3 + $0x78] sm:$0xff]
      %v2348 = vld [vmem:[#allocation3 + $0x80] sm:$0xff]
      %v2349 = vld [vmem:[#allocation3 + $0x88] sm:$0xff]
      %v2350 = vld [vmem:[#allocation3 + $0x90] sm:$0xff]
      %v2351 = vld [vmem:[#allocation3 + $0x98] sm:$0xff]
      %v2352 = vld [vmem:[#allocation3 + $0xa0] sm:$0xff]
      %v2353 = vld [vmem:[#allocation3 + $0xa8] sm:$0xff]
      %v2354 = vld [vmem:[#allocation3 + $0xb0] sm:$0xff]
      %v2355 = vld [vmem:[#allocation3 + $0xb8] sm:$0xff]
      %v2356 = vld [vmem:[#allocation3 + $0xc0] sm:$0xff]
      %v2357 = vld [vmem:[#allocation3 + $0xc8] sm:$0xff]
      %v2358 = vld [vmem:[#allocation3 + $0xd0] sm:$0xff]
      %v2359 = vld [vmem:[#allocation3 + $0xd8] sm:$0xff]
      %v2360 = vld [vmem:[#allocation3 + $0xe0] sm:$0xff]
      %v2361 = vld [vmem:[#allocation3 + $0xe8] sm:$0xff]
      %v2362 = vld [vmem:[#allocation3 + $0xf0] sm:$0xff]
      %v2363 = vld [vmem:[#allocation3 + $0xf8] sm:$0xff]
      %vm2364 = vcmp.gt.f32.partialorder %v2332, 0.0
      %vm2365 = vcmp.gt.f32.partialorder %v2333, 0.0
      %vm2366 = vcmp.gt.f32.partialorder %v2334, 0.0
      %vm2367 = vcmp.gt.f32.partialorder %v2335, 0.0
      %vm2368 = vcmp.gt.f32.partialorder %v2336, 0.0
      %vm2369 = vcmp.gt.f32.partialorder %v2337, 0.0
      %vm2370 = vcmp.gt.f32.partialorder %v2338, 0.0
      %vm2371 = vcmp.gt.f32.partialorder %v2339, 0.0
      %vm2372 = vcmp.gt.f32.partialorder %v2340, 0.0
      %vm2373 = vcmp.gt.f32.partialorder %v2341, 0.0
      %vm2374 = vcmp.gt.f32.partialorder %v2342, 0.0
      %vm2375 = vcmp.gt.f32.partialorder %v2343, 0.0
      %vm2376 = vcmp.gt.f32.partialorder %v2344, 0.0
      %vm2377 = vcmp.gt.f32.partialorder %v2345, 0.0
      %vm2378 = vcmp.gt.f32.partialorder %v2346, 0.0
      %vm2379 = vcmp.gt.f32.partialorder %v2347, 0.0
      %vm2380 = vcmp.gt.f32.partialorder %v2348, 0.0
      %vm2381 = vcmp.gt.f32.partialorder %v2349, 0.0
      %vm2382 = vcmp.gt.f32.partialorder %v2350, 0.0
      %vm2383 = vcmp.gt.f32.partialorder %v2351, 0.0
      %vm2384 = vcmp.gt.f32.partialorder %v2352, 0.0
      %vm2385 = vcmp.gt.f32.partialorder %v2353, 0.0
      %vm2386 = vcmp.gt.f32.partialorder %v2354, 0.0
      %vm2387 = vcmp.gt.f32.partialorder %v2355, 0.0
      %vm2388 = vcmp.gt.f32.partialorder %v2356, 0.0
      %vm2389 = vcmp.gt.f32.partialorder %v2357, 0.0
      %vm2390 = vcmp.gt.f32.partialorder %v2358, 0.0
      %vm2391 = vcmp.gt.f32.partialorder %v2359, 0.0
      %vm2392 = vcmp.gt.f32.partialorder %v2360, 0.0
      %vm2393 = vcmp.gt.f32.partialorder %v2361, 0.0
      %vm2394 = vcmp.gt.f32.partialorder %v2362, 0.0
      %vm2395 = vcmp.gt.f32.partialorder %v2363, 0.0
      %v2396 = vrcp.pop %v2332
      %v2397 = vrcp.pop %v2333
      %v2398 = vrcp.pop %v2334
      %v2399 = vrcp.pop %v2335
      %v2400 = vrcp.pop %v2336
      %v2401 = vrcp.pop %v2337
      %v2402 = vrcp.pop %v2338
      %v2403 = vrcp.pop %v2339
      %v2404 = vrcp.pop %v2340
      %v2405 = vrcp.pop %v2341
      %v2406 = vrcp.pop %v2342
      %v2407 = vrcp.pop %v2343
      %v2408 = vrcp.pop %v2344
      %v2409 = vrcp.pop %v2345
      %v2410 = vrcp.pop %v2346
      %v2411 = vrcp.pop %v2347
      %v2412 = vrcp.pop %v2348
      %v2413 = vrcp.pop %v2349
      %v2414 = vrcp.pop %v2350
      %v2415 = vrcp.pop %v2351
      %v2416 = vrcp.pop %v2352
      %v2417 = vrcp.pop %v2353
      %v2418 = vrcp.pop %v2354
      %v2419 = vrcp.pop %v2355
      %v2420 = vrcp.pop %v2356
      %v2421 = vrcp.pop %v2357
      %v2422 = vrcp.pop %v2358
      %v2423 = vrcp.pop %v2359
      %v2424 = vrcp.pop %v2360
      %v2425 = vrcp.pop %v2361
      %v2426 = vrcp.pop %v2362
      %v2427 = vrcp.pop %v2363
      %v2428 = vsel %vm2364, %v2396, 0.0
      %v2429 = vsel %vm2365, %v2397, 0.0
      %v2430 = vsel %vm2366, %v2398, 0.0
      %v2431 = vsel %vm2367, %v2399, 0.0
      %v2432 = vsel %vm2368, %v2400, 0.0
      %v2433 = vsel %vm2369, %v2401, 0.0
      %v2434 = vsel %vm2370, %v2402, 0.0
      %v2435 = vsel %vm2371, %v2403, 0.0
      %v2436 = vsel %vm2372, %v2404, 0.0
      %v2437 = vsel %vm2373, %v2405, 0.0
      %v2438 = vsel %vm2374, %v2406, 0.0
      %v2439 = vsel %vm2375, %v2407, 0.0
      %v2440 = vsel %vm2376, %v2408, 0.0
      %v2441 = vsel %vm2377, %v2409, 0.0
      %v2442 = vsel %vm2378, %v2410, 0.0
      %v2443 = vsel %vm2379, %v2411, 0.0
      %v2444 = vsel %vm2380, %v2412, 0.0
      %v2445 = vsel %vm2381, %v2413, 0.0
      %v2446 = vsel %vm2382, %v2414, 0.0
      %v2447 = vsel %vm2383, %v2415, 0.0
      %v2448 = vsel %vm2384, %v2416, 0.0
      %v2449 = vsel %vm2385, %v2417, 0.0
      %v2450 = vsel %vm2386, %v2418, 0.0
      %v2451 = vsel %vm2387, %v2419, 0.0
      %v2452 = vsel %vm2388, %v2420, 0.0
      %v2453 = vsel %vm2389, %v2421, 0.0
      %v2454 = vsel %vm2390, %v2422, 0.0
      %v2455 = vsel %vm2391, %v2423, 0.0
      %v2456 = vsel %vm2392, %v2424, 0.0
      %v2457 = vsel %vm2393, %v2425, 0.0
      %v2458 = vsel %vm2394, %v2426, 0.0
      %v2459 = vsel %vm2395, %v2427, 0.0
      %v2460 = vld [vmem:[#allocation4] sm:$0xff]
      %v2461 = vld [vmem:[#allocation4 + $0x8] sm:$0xff]
      %v2462 = vld [vmem:[#allocation4 + $0x10] sm:$0xff]
      %v2463 = vld [vmem:[#allocation4 + $0x18] sm:$0xff]
      %v2464 = vld [vmem:[#allocation4 + $0x20] sm:$0xff]
      %v2465 = vld [vmem:[#allocation4 + $0x28] sm:$0xff]
      %v2466 = vld [vmem:[#allocation4 + $0x30] sm:$0xff]
      %v2467 = vld [vmem:[#allocation4 + $0x38] sm:$0xff]
      %v2468 = vld [vmem:[#allocation4 + $0x40] sm:$0xff]
      %v2469 = vld [vmem:[#allocation4 + $0x48] sm:$0xff]
      %v2470 = vld [vmem:[#allocation4 + $0x50] sm:$0xff]
      %v2471 = vld [vmem:[#allocation4 + $0x58] sm:$0xff]
      %v2472 = vld [vmem:[#allocation4 + $0x60] sm:$0xff]
      %v2473 = vld [vmem:[#allocation4 + $0x68] sm:$0xff]
      %v2474 = vld [vmem:[#allocation4 + $0x70] sm:$0xff]
      %v2475 = vld [vmem:[#allocation4 + $0x78] sm:$0xff]
      %v2476 = vld [vmem:[#allocation4 + $0x80] sm:$0xff]
      %v2477 = vld [vmem:[#allocation4 + $0x88] sm:$0xff]
      %v2478 = vld [vmem:[#allocation4 + $0x90] sm:$0xff]
      %v2479 = vld [vmem:[#allocation4 + $0x98] sm:$0xff]
      %v2480 = vld [vmem:[#allocation4 + $0xa0] sm:$0xff]
      %v2481 = vld [vmem:[#allocation4 + $0xa8] sm:$0xff]
      %v2482 = vld [vmem:[#allocation4 + $0xb0] sm:$0xff]
      %v2483 = vld [vmem:[#allocation4 + $0xb8] sm:$0xff]
      %v2484 = vld [vmem:[#allocation4 + $0xc0] sm:$0xff]
      %v2485 = vld [vmem:[#allocation4 + $0xc8] sm:$0xff]
      %v2486 = vld [vmem:[#allocation4 + $0xd0] sm:$0xff]
      %v2487 = vld [vmem:[#allocation4 + $0xd8] sm:$0xff]
      %v2488 = vld [vmem:[#allocation4 + $0xe0] sm:$0xff]
      %v2489 = vld [vmem:[#allocation4 + $0xe8] sm:$0xff]
      %v2490 = vld [vmem:[#allocation4 + $0xf0] sm:$0xff]
      %v2491 = vld [vmem:[#allocation4 + $0xf8] sm:$0xff]
      %2493 = vset.pattern.permute.xlu0 0
      %2494 = vperm.xlu0 %2493, %v2428
      %v2495 = vpop.permute.xlu0 %2494
      %2498 = vset.pattern.permute.xlu0 0
      %2499 = vperm.xlu0 %2498, %v2429
      %v2500 = vpop.permute.xlu0 %2499
      %2503 = vset.pattern.permute.xlu0 0
      %2504 = vperm.xlu0 %2503, %v2430
      %v2505 = vpop.permute.xlu0 %2504
      %2508 = vset.pattern.permute.xlu0 0
      %2509 = vperm.xlu0 %2508, %v2431
      %v2510 = vpop.permute.xlu0 %2509
      %2513 = vset.pattern.permute.xlu0 0
      %2514 = vperm.xlu0 %2513, %v2432
      %v2515 = vpop.permute.xlu0 %2514
      %2518 = vset.pattern.permute.xlu0 0
      %2519 = vperm.xlu0 %2518, %v2433
      %v2520 = vpop.permute.xlu0 %2519
      %2523 = vset.pattern.permute.xlu0 0
      %2524 = vperm.xlu0 %2523, %v2434
      %v2525 = vpop.permute.xlu0 %2524
      %2528 = vset.pattern.permute.xlu0 0
      %2529 = vperm.xlu0 %2528, %v2435
      %v2530 = vpop.permute.xlu0 %2529
      %2533 = vset.pattern.permute.xlu0 0
      %2534 = vperm.xlu0 %2533, %v2436
      %v2535 = vpop.permute.xlu0 %2534
      %2538 = vset.pattern.permute.xlu0 0
      %2539 = vperm.xlu0 %2538, %v2437
      %v2540 = vpop.permute.xlu0 %2539
      %2543 = vset.pattern.permute.xlu0 0
      %2544 = vperm.xlu0 %2543, %v2438
      %v2545 = vpop.permute.xlu0 %2544
      %2548 = vset.pattern.permute.xlu0 0
      %2549 = vperm.xlu0 %2548, %v2439
      %v2550 = vpop.permute.xlu0 %2549
      %2553 = vset.pattern.permute.xlu0 0
      %2554 = vperm.xlu0 %2553, %v2440
      %v2555 = vpop.permute.xlu0 %2554
      %2558 = vset.pattern.permute.xlu0 0
      %2559 = vperm.xlu0 %2558, %v2441
      %v2560 = vpop.permute.xlu0 %2559
      %2563 = vset.pattern.permute.xlu0 0
      %2564 = vperm.xlu0 %2563, %v2442
      %v2565 = vpop.permute.xlu0 %2564
      %2568 = vset.pattern.permute.xlu0 0
      %2569 = vperm.xlu0 %2568, %v2443
      %v2570 = vpop.permute.xlu0 %2569
      %2573 = vset.pattern.permute.xlu0 0
      %2574 = vperm.xlu0 %2573, %v2444
      %v2575 = vpop.permute.xlu0 %2574
      %2578 = vset.pattern.permute.xlu0 0
      %2579 = vperm.xlu0 %2578, %v2445
      %v2580 = vpop.permute.xlu0 %2579
      %2583 = vset.pattern.permute.xlu0 0
      %2584 = vperm.xlu0 %2583, %v2446
      %v2585 = vpop.permute.xlu0 %2584
      %2588 = vset.pattern.permute.xlu0 0
      %2589 = vperm.xlu0 %2588, %v2447
      %v2590 = vpop.permute.xlu0 %2589
      %2593 = vset.pattern.permute.xlu0 0
      %2594 = vperm.xlu0 %2593, %v2448
      %v2595 = vpop.permute.xlu0 %2594
      %2598 = vset.pattern.permute.xlu0 0
      %2599 = vperm.xlu0 %2598, %v2449
      %v2600 = vpop.permute.xlu0 %2599
      %2603 = vset.pattern.permute.xlu0 0
      %2604 = vperm.xlu0 %2603, %v2450
      %v2605 = vpop.permute.xlu0 %2604
      %2608 = vset.pattern.permute.xlu0 0
      %2609 = vperm.xlu0 %2608, %v2451
      %v2610 = vpop.permute.xlu0 %2609
      %2613 = vset.pattern.permute.xlu0 0
      %2614 = vperm.xlu0 %2613, %v2452
      %v2615 = vpop.permute.xlu0 %2614
      %2618 = vset.pattern.permute.xlu0 0
      %2619 = vperm.xlu0 %2618, %v2453
      %v2620 = vpop.permute.xlu0 %2619
      %2623 = vset.pattern.permute.xlu0 0
      %2624 = vperm.xlu0 %2623, %v2454
      %v2625 = vpop.permute.xlu0 %2624
      %2628 = vset.pattern.permute.xlu0 0
      %2629 = vperm.xlu0 %2628, %v2455
      %v2630 = vpop.permute.xlu0 %2629
      %2633 = vset.pattern.permute.xlu0 0
      %2634 = vperm.xlu0 %2633, %v2456
      %v2635 = vpop.permute.xlu0 %2634
      %2638 = vset.pattern.permute.xlu0 0
      %2639 = vperm.xlu0 %2638, %v2457
      %v2640 = vpop.permute.xlu0 %2639
      %2643 = vset.pattern.permute.xlu0 0
      %2644 = vperm.xlu0 %2643, %v2458
      %v2645 = vpop.permute.xlu0 %2644
      %2648 = vset.pattern.permute.xlu0 0
      %2649 = vperm.xlu0 %2648, %v2459
      %v2650 = vpop.permute.xlu0 %2649
      %v2652 = vmul.f32 %v2460, %v2495
      %v2653 = vmul.f32 %v2461, %v2500
      %v2654 = vmul.f32 %v2462, %v2505
      %v2655 = vmul.f32 %v2463, %v2510
      %v2656 = vmul.f32 %v2464, %v2515
      %v2657 = vmul.f32 %v2465, %v2520
      %v2658 = vmul.f32 %v2466, %v2525
      %v2659 = vmul.f32 %v2467, %v2530
      %v2660 = vmul.f32 %v2468, %v2535
      %v2661 = vmul.f32 %v2469, %v2540
      %v2662 = vmul.f32 %v2470, %v2545
      %v2663 = vmul.f32 %v2471, %v2550
      %v2664 = vmul.f32 %v2472, %v2555
      %v2665 = vmul.f32 %v2473, %v2560
      %v2666 = vmul.f32 %v2474, %v2565
      %v2667 = vmul.f32 %v2475, %v2570
      %v2668 = vmul.f32 %v2476, %v2575
      %v2669 = vmul.f32 %v2477, %v2580
      %v2670 = vmul.f32 %v2478, %v2585
      %v2671 = vmul.f32 %v2479, %v2590
      %v2672 = vmul.f32 %v2480, %v2595
      %v2673 = vmul.f32 %v2481, %v2600
      %v2674 = vmul.f32 %v2482, %v2605
      %v2675 = vmul.f32 %v2483, %v2610
      %v2676 = vmul.f32 %v2484, %v2615
      %v2677 = vmul.f32 %v2485, %v2620
      %v2678 = vmul.f32 %v2486, %v2625
      %v2679 = vmul.f32 %v2487, %v2630
      %v2680 = vmul.f32 %v2488, %v2635
      %v2681 = vmul.f32 %v2489, %v2640
      %v2682 = vmul.f32 %v2490, %v2645
      %v2683 = vmul.f32 %v2491, %v2650
      %v2684 = vld [vmem:[#allocation11] sm:$0x1]
      %v2686 = vlaneseq
      %v2687 = vshrl.u32 %v2686, 7
      %v2688 = vsub.s32 0, %v2687
      %v2689 = vrot.slane %v2684, %v2688
      %v2691 = vadd.f32 %v2652, %v2689
      %v2692 = vadd.f32 %v2653, %v2689
      %v2693 = vadd.f32 %v2654, %v2689
      %v2694 = vadd.f32 %v2655, %v2689
      %v2695 = vadd.f32 %v2656, %v2689
      %v2696 = vadd.f32 %v2657, %v2689
      %v2697 = vadd.f32 %v2658, %v2689
      %v2698 = vadd.f32 %v2659, %v2689
      %v2699 = vadd.f32 %v2660, %v2689
      %v2700 = vadd.f32 %v2661, %v2689
      %v2701 = vadd.f32 %v2662, %v2689
      %v2702 = vadd.f32 %v2663, %v2689
      %v2703 = vadd.f32 %v2664, %v2689
      %v2704 = vadd.f32 %v2665, %v2689
      %v2705 = vadd.f32 %v2666, %v2689
      %v2706 = vadd.f32 %v2667, %v2689
      %v2707 = vadd.f32 %v2668, %v2689
      %v2708 = vadd.f32 %v2669, %v2689
      %v2709 = vadd.f32 %v2670, %v2689
      %v2710 = vadd.f32 %v2671, %v2689
      %v2711 = vadd.f32 %v2672, %v2689
      %v2712 = vadd.f32 %v2673, %v2689
      %v2713 = vadd.f32 %v2674, %v2689
      %v2714 = vadd.f32 %v2675, %v2689
      %v2715 = vadd.f32 %v2676, %v2689
      %v2716 = vadd.f32 %v2677, %v2689
      %v2717 = vadd.f32 %v2678, %v2689
      %v2718 = vadd.f32 %v2679, %v2689
      %v2719 = vadd.f32 %v2680, %v2689
      %v2720 = vadd.f32 %v2681, %v2689
      %v2721 = vadd.f32 %v2682, %v2689
      %v2722 = vadd.f32 %v2683, %v2689
      %v2723 = vmax.f32 %v2691, 0.0
      %v2724 = vmax.f32 %v2692, 0.0
      %v2725 = vmax.f32 %v2693, 0.0
      %v2726 = vmax.f32 %v2694, 0.0
      %v2727 = vmax.f32 %v2695, 0.0
      %v2728 = vmax.f32 %v2696, 0.0
      %v2729 = vmax.f32 %v2697, 0.0
      %v2730 = vmax.f32 %v2698, 0.0
      %v2731 = vmax.f32 %v2699, 0.0
      %v2732 = vmax.f32 %v2700, 0.0
      %v2733 = vmax.f32 %v2701, 0.0
      %v2734 = vmax.f32 %v2702, 0.0
      %v2735 = vmax.f32 %v2703, 0.0
      %v2736 = vmax.f32 %v2704, 0.0
      %v2737 = vmax.f32 %v2705, 0.0
      %v2738 = vmax.f32 %v2706, 0.0
      %v2739 = vmax.f32 %v2707, 0.0
      %v2740 = vmax.f32 %v2708, 0.0
      %v2741 = vmax.f32 %v2709, 0.0
      %v2742 = vmax.f32 %v2710, 0.0
      %v2743 = vmax.f32 %v2711, 0.0
      %v2744 = vmax.f32 %v2712, 0.0
      %v2745 = vmax.f32 %v2713, 0.0
      %v2746 = vmax.f32 %v2714, 0.0
      %v2747 = vmax.f32 %v2715, 0.0
      %v2748 = vmax.f32 %v2716, 0.0
      %v2749 = vmax.f32 %v2717, 0.0
      %v2750 = vmax.f32 %v2718, 0.0
      %v2751 = vmax.f32 %v2719, 0.0
      %v2752 = vmax.f32 %v2720, 0.0
      %v2753 = vmax.f32 %v2721, 0.0
      %v2754 = vmax.f32 %v2722, 0.0
      %2755 = vst [vmem:[#allocation14] sm:$0xff] %v2723
      %2756 = vst [vmem:[#allocation14 + $0x8] sm:$0xff] %v2724
      %2757 = vst [vmem:[#allocation14 + $0x10] sm:$0xff] %v2725
      %2758 = vst [vmem:[#allocation14 + $0x18] sm:$0xff] %v2726
      %2759 = vst [vmem:[#allocation14 + $0x20] sm:$0xff] %v2727
      %2760 = vst [vmem:[#allocation14 + $0x28] sm:$0xff] %v2728
      %2761 = vst [vmem:[#allocation14 + $0x30] sm:$0xff] %v2729
      %2762 = vst [vmem:[#allocation14 + $0x38] sm:$0xff] %v2730
      %2763 = vst [vmem:[#allocation14 + $0x40] sm:$0xff] %v2731
      %2764 = vst [vmem:[#allocation14 + $0x48] sm:$0xff] %v2732
      %2765 = vst [vmem:[#allocation14 + $0x50] sm:$0xff] %v2733
      %2766 = vst [vmem:[#allocation14 + $0x58] sm:$0xff] %v2734
      %2767 = vst [vmem:[#allocation14 + $0x60] sm:$0xff] %v2735
      %2768 = vst [vmem:[#allocation14 + $0x68] sm:$0xff] %v2736
      %2769 = vst [vmem:[#allocation14 + $0x70] sm:$0xff] %v2737
      %2770 = vst [vmem:[#allocation14 + $0x78] sm:$0xff] %v2738
      %2771 = vst [vmem:[#allocation14 + $0x80] sm:$0xff] %v2739
      %2772 = vst [vmem:[#allocation14 + $0x88] sm:$0xff] %v2740
      %2773 = vst [vmem:[#allocation14 + $0x90] sm:$0xff] %v2741
      %2774 = vst [vmem:[#allocation14 + $0x98] sm:$0xff] %v2742
      %2775 = vst [vmem:[#allocation14 + $0xa0] sm:$0xff] %v2743
      %2776 = vst [vmem:[#allocation14 + $0xa8] sm:$0xff] %v2744
      %2777 = vst [vmem:[#allocation14 + $0xb0] sm:$0xff] %v2745
      %2778 = vst [vmem:[#allocation14 + $0xb8] sm:$0xff] %v2746
      %2779 = vst [vmem:[#allocation14 + $0xc0] sm:$0xff] %v2747
      %2780 = vst [vmem:[#allocation14 + $0xc8] sm:$0xff] %v2748
      %2781 = vst [vmem:[#allocation14 + $0xd0] sm:$0xff] %v2749
      %2782 = vst [vmem:[#allocation14 + $0xd8] sm:$0xff] %v2750
      %2783 = vst [vmem:[#allocation14 + $0xe0] sm:$0xff] %v2751
      %2784 = vst [vmem:[#allocation14 + $0xe8] sm:$0xff] %v2752
      %2785 = vst [vmem:[#allocation14 + $0xf0] sm:$0xff] %v2753
      %2786 = vst [vmem:[#allocation14 + $0xf8] sm:$0xff] %v2754
    $region49: #{tpu_custom_call.1} parent=1 // pred_fallthru
      _
    // Predicated region
    $region50: #{tpu_custom_call.1} parent=1 // pred_check
      _
    $region51: #{tpu_custom_call.1} parent=1 // pred_check_branch
      %2788 = sbr.rel (0) target = $region53
    $region52: #{tpu_custom_call.1} parent=1 // pred_region
      %s2790 = ssub.s32 4096, 4096
      %2791 = vsyncadd [#allocation7], %s2790
      %s2792 = sshll.u32 [#allocation14], 4
      %s2793 = int_to_ptr.vmem [resolvable:$true] %s2792
      %2798 = dma.vmem_to_hbm [thread:$0]  %s2793, 4096, %s5, [#allocation7], 128, 128, 8
    $region53: #{tpu_custom_call.1} parent=1 // pred_fallthru
      _
    // Predicated region
    $region54: #{tpu_custom_call.1} parent=1 // pred_check
      _
    $region55: #{tpu_custom_call.1} parent=1 // pred_check_branch
      %2800 = sbr.rel (0) target = $region57
    $region56: #{tpu_custom_call.1} parent=1 // pred_region
      %2801 = dma.done [#allocation7], 4096
    $region57: #{tpu_custom_call.1} parent=1 // pred_fallthru
      _
    %2802 = vsyncpa [#allocation6], 1
    %2803 = vsyncpa [#allocation9], 1
    %2804 = vsyncpa [#allocation12], 1
    %2805 = vsyncpa [#allocation7], 1

</llo_original>
